<compile_context>
chip_gen: v6e
topology: v6e:2x2x1
jax: 0.10.0
libtpu: 0.0.40
codegen_flags: <defaults>
</compile_context>

<pallas_src>
import functools

import numpy as np
import jax
import jax.numpy as jnp
from jax import lax
from jax.experimental import pallas as pl
from jax.experimental.pallas import tpu as pltpu


# ----------------------------------------------------------------------------
# Fused kernel: hoisted input projection + layer-wavefront recurrence + FC.
# Gate layout inside the kernel (after wrapper-side permutation):
#   columns = [ i(all layers) | f(all layers) | g(all layers) | o(all layers) ]
#   each group is L*H lanes wide, layer-major, matching the (B, L*H) h/c tile.
# ----------------------------------------------------------------------------
def _wavefront_lstm_fc_kernel(x_ref, layer_ids_ref, w_ih0_ref, bias_ref,
                              w_comb_ref, fc_w_ref, fc_b_ref,
                              out_ref, xw_scr, *, num_layers, seq_len, hidden):
    L, S, H = num_layers, seq_len, hidden
    LH = L * H
    B = x_ref.shape[1]
    I = x_ref.shape[2]

    # --- Hoisted layer-0 input projection (+ all layers' biases), one big MXU
    #     matmul over all S*B rows, done once outside the serial recurrence.
    x_flat = x_ref[...].reshape(S * B, I)
    xw = jnp.dot(x_flat, w_ih0_ref[...],
                 preferred_element_type=jnp.float32) + bias_ref[...]
    xw_scr[...] = xw.reshape(S, B, 4 * LH)

    w_comb = w_comb_ref[...]              # (L*H, 4*L*H) block-structured weights
    layer_ids = layer_ids_ref[...]        # (1, L*H) int32: lane -> layer index

    def step(w, carry):
        # Wavefront step w: layer l processes timestep t = w - l (masked when
        # t is outside [0, S)).  Dependencies (layer l at t-1, layer l-1 at t)
        # were both produced at step w-1 and live in h_all.
        h_all, c_all = carry                                   # (B, L*H) each
        t0 = jnp.minimum(w, S - 1)                             # layer-0 time idx (clamped)

        gates = xw_scr[t0] + jnp.dot(h_all, w_comb,
                                     preferred_element_type=jnp.float32)  # (B, 4*L*H)

        # Single full-width tanh; sigmoid(z) = 0.5*tanh(z/2)+0.5, the 0.5
        # pre-scale of i/f/o columns is already folded into the weights/bias.
        t = jnp.tanh(gates)
        sg = 0.5 * t + 0.5                                     # cheap VPU affine
        i_g = sg[:, 0 * LH:1 * LH]
        f_g = sg[:, 1 * LH:2 * LH]
        g_g = t[:, 2 * LH:3 * LH]
        o_g = sg[:, 3 * LH:4 * LH]

        c_new = f_g * c_all + i_g * g_g                        # (B, L*H) lane-dense
        h_new = o_g * jnp.tanh(c_new)

        # Per-layer activity mask: layer l is live iff 0 <= w - l < S.
        t_of_layer = w - layer_ids                             # (1, L*H)
        active = (t_of_layer >= 0) & (t_of_layer < S)
        h_all = jnp.where(active, h_new, h_all)
        c_all = jnp.where(active, c_new, c_all)
        return (h_all, c_all)

    total_steps = S + L - 1
    init = (jnp.zeros((B, LH), jnp.float32), jnp.zeros((B, LH), jnp.float32))
    # Full unroll for short wavefronts (scheduler visibility); capped otherwise.
    unroll = True if total_steps <= 16 else 8
    h_all, _ = lax.fori_loop(0, total_steps, step, init, unroll=unroll)

    # Final hidden state of the LAST layer at the LAST timestep -> fused FC.
    h_last = h_all[:, (L - 1) * H: L * H]                      # (B, H)
    out_ref[...] = (jnp.dot(h_last, fc_w_ref[...],
                            preferred_element_type=jnp.float32)
                    + fc_b_ref[...]).astype(out_ref.dtype)


# ----------------------------------------------------------------------------
# Parameters (raw PyTorch layout) and wrapper-side weight preparation.
# ----------------------------------------------------------------------------
def init_params(key, input_size, hidden_size, num_layers, out_features=2):
    """PyTorch-style U(-1/sqrt(H), 1/sqrt(H)) init, stored in PyTorch layout."""
    params = {"layers": []}
    bound = 1.0 / np.sqrt(hidden_size)
    for layer in range(num_layers):
        in_sz = input_size if layer == 0 else hidden_size
        k = jax.random.fold_in(key, layer)
        k1, k2, k3, k4 = jax.random.split(k, 4)
        params["layers"].append(dict(
            w_ih=jax.random.uniform(k1, (4 * hidden_size, in_sz), jnp.float32, -bound, bound),
            w_hh=jax.random.uniform(k2, (4 * hidden_size, hidden_size), jnp.float32, -bound, bound),
            b_ih=jax.random.uniform(k3, (4 * hidden_size,), jnp.float32, -bound, bound),
            b_hh=jax.random.uniform(k4, (4 * hidden_size,), jnp.float32, -bound, bound)))
    kf = jax.random.fold_in(key, 1000)
    kf1, kf2 = jax.random.split(kf)
    params["fc_w"] = jax.random.uniform(kf1, (out_features, hidden_size), jnp.float32, -bound, bound)
    params["fc_b"] = jax.random.uniform(kf2, (out_features,), jnp.float32, -bound, bound)
    return params


def _prepare_kernel_weights(params):
    """Build the block-structured, 0.5-folded, gate-major-permuted weights."""
    layers = params["layers"]
    L = len(layers)
    H = layers[0]["w_hh"].shape[1]
    I = layers[0]["w_ih"].shape[1]
    LH = L * H

    # Fold the 0.5 pre-scale of the sigmoid-via-tanh trick into i/f/o rows.
    scale = jnp.concatenate([jnp.full((H,), 0.5), jnp.full((H,), 0.5),
                             jnp.ones((H,)), jnp.full((H,), 0.5)]).astype(jnp.float32)

    w_comb = jnp.zeros((LH, 4 * LH), jnp.float32)   # recurrent + inter-layer blocks
    w_ih0 = jnp.zeros((I, 4 * LH), jnp.float32)     # layer-0 input projection (expanded)
    bias = jnp.zeros((4 * LH,), jnp.float32)
    for l, lp in enumerate(layers):
        w_ih_s = (lp["w_ih"] * scale[:, None]).T    # (in_l, 4H)
        w_hh_s = (lp["w_hh"] * scale[:, None]).T    # (H, 4H)
        b_s = (lp["b_ih"] + lp["b_hh"]) * scale     # (4H,)
        cols = slice(l * 4 * H, (l + 1) * 4 * H)
        w_comb = w_comb.at[l * H:(l + 1) * H, cols].set(w_hh_s)          # h_l -> gates_l
        if l == 0:
            w_ih0 = w_ih0.at[:, cols].set(w_ih_s)                        # x   -> gates_0
        else:
            w_comb = w_comb.at[(l - 1) * H:l * H, cols].set(w_ih_s)      # h_{l-1} -> gates_l
        bias = bias.at[cols].set(b_s)

    # Column permutation: layer-major (i,f,g,o per layer) -> gate-major
    # [ i_0..i_{L-1} | f_* | g_* | o_* ], matching the (B, L*H) h/c lane layout.
    perm = np.concatenate([np.arange(l * 4 * H + k * H, l * 4 * H + (k + 1) * H)
                           for k in range(4) for l in range(L)])
    w_comb = w_comb[:, perm]
    w_ih0 = w_ih0[:, perm]
    bias = bias[perm][None, :]

    layer_ids = jnp.repeat(jnp.arange(L, dtype=jnp.int32), H)[None, :]   # (1, L*H)
    fc_w_t = params["fc_w"].T                                            # (H, 2)
    fc_b = params["fc_b"][None, :]                                       # (1, 2)
    return layer_ids, w_ih0, bias, w_comb, fc_w_t, fc_b


@jax.jit
def lstm_model_forward(params, x_bsi):
    """x_bsi: (batch, seq, input_size) -> (batch, 2)."""
    B, S, _ = x_bsi.shape
    L = len(params["layers"])
    H = params["layers"][0]["w_hh"].shape[1]
    O = params["fc_w"].shape[0]

    layer_ids, w_ih0, bias, w_comb, fc_w_t, fc_b = _prepare_kernel_weights(params)

    # Pad batch (sublane dim) to a multiple of 8 for full vreg / MXU rows.
    B_pad = max(8, ((B + 7) // 8) * 8)
    x = jnp.transpose(x_bsi, (1, 0, 2)).astype(jnp.float32)   # torch.transpose(x, 1, 0)
    if B_pad != B:
        x = jnp.pad(x, ((0, 0), (0, B_pad - B), (0, 0)))

    kernel = functools.partial(_wavefront_lstm_fc_kernel,
                               num_layers=L, seq_len=S, hidden=H)
    vmem = pl.BlockSpec(memory_space=pltpu.MemorySpace.VMEM)

    out = pl.pallas_call(
        kernel,
        out_shape=jax.ShapeDtypeStruct((B_pad, O), jnp.float32),
        in_specs=[vmem] * 7,
        out_specs=vmem,
        scratch_shapes=[
            pltpu.VMEM((S, B_pad, 4 * L * H), jnp.float32),   # hoisted x-projection (+bias)
        ],
        compiler_params=pltpu.CompilerParams(vmem_limit_bytes=16 * 1024 * 1024),
    )(x, layer_ids, w_ih0, bias, w_comb, fc_w_t, fc_b)
    return out[:B]


# ----------------------------------------------------------------------------
# Pure-JAX reference (uses the RAW PyTorch-layout weights, so it independently
# checks the folding / permutation / wavefront done in the wrapper + kernel).
# ----------------------------------------------------------------------------
def _reference_forward(params, x_bsi):
    x = jnp.transpose(x_bsi, (1, 0, 2))
    H = params["layers"][0]["w_hh"].shape[1]
    for lp in params["layers"]:
        S, B, _ = x.shape
        h = jnp.zeros((B, H), jnp.float32)
        c = jnp.zeros((B, H), jnp.float32)
        outs = []
        for t in range(S):
            z = x[t] @ lp["w_ih"].T + h @ lp["w_hh"].T + lp["b_ih"] + lp["b_hh"]
            i = jax.nn.sigmoid(z[:, 0 * H:1 * H])
            f = jax.nn.sigmoid(z[:, 1 * H:2 * H])
            g = jnp.tanh(z[:, 2 * H:3 * H])
            o = jax.nn.sigmoid(z[:, 3 * H:4 * H])
            c = f * c + i * g
            h = o * jnp.tanh(c)
            outs.append(h)
        x = jnp.stack(outs, axis=0)
    return x[-1] @ params["fc_w"].T + params["fc_b"]


if __name__ == "__main__":
    BATCH, SEQ, INPUT_SIZE, HIDDEN_SIZE, NUM_LAYERS = 2, 8, 16, 32, 2

    key = jax.random.PRNGKey(0)
    kx, kp = jax.random.split(key)
    x = jax.random.normal(kx, (BATCH, SEQ, INPUT_SIZE), jnp.float32)
    params = init_params(kp, INPUT_SIZE, HIDDEN_SIZE, NUM_LAYERS)

    out = lstm_model_forward(params, x)
    out = jax.block_until_ready(out)

    ref = _reference_forward(params, x)
    assert out.shape == (BATCH, 2)
    assert jnp.max(jnp.abs(out - ref)) < 1e-4, "Pallas output mismatch vs reference"

    print("KERNEL_OK")
</pallas_src>

<mosaic_0001>
module attributes {stable_mosaic.version = 11 : i64} {
  func.func @_wavefront_lstm_fc_kernel(%arg0: memref<8x8x16xf32, #tpu.memory_space<vmem>>, %arg1: memref<1x64xi32, #tpu.memory_space<vmem>>, %arg2: memref<16x256xf32, #tpu.memory_space<vmem>>, %arg3: memref<1x256xf32, #tpu.memory_space<vmem>>, %arg4: memref<64x256xf32, #tpu.memory_space<vmem>>, %arg5: memref<32x2xf32, #tpu.memory_space<vmem>>, %arg6: memref<1x2xf32, #tpu.memory_space<vmem>>, %arg7: memref<8x2xf32, #tpu.memory_space<vmem>>, %arg8: memref<8x8x256xf32, #tpu.memory_space<vmem>>) attributes {dimension_semantics = [], scalar_prefetch = 0 : i64, scratch_operands = 1 : i64, tpu.core_type = #tpu.core_type<tc>} {
    %c0 = arith.constant 0 : index
    %c0_0 = arith.constant 0 : index
    %c0_1 = arith.constant 0 : index
    %0 = vector.load %arg0[%c0, %c0_0, %c0_1] : memref<8x8x16xf32, #tpu.memory_space<vmem>>, vector<8x8x16xf32>
    %1 = vector.shape_cast %0 : vector<8x8x16xf32> to vector<64x16xf32>
    %c0_2 = arith.constant 0 : index
    %c0_3 = arith.constant 0 : index
    %2 = vector.load %arg2[%c0_2, %c0_3] : memref<16x256xf32, #tpu.memory_space<vmem>>, vector<16x256xf32>
    %cst = arith.constant dense<0.000000e+00> : vector<64x256xf32>
    %3 = tpu.matmul %1, %2, %cst {dimension_numbers = #tpu.dot_dimension_numbers<[1], [0], [0], [1], [0, 0, 1, 1], [], []>} : vector<64x16xf32>, vector<16x256xf32>, vector<64x256xf32> -> vector<64x256xf32>
    %c0_4 = arith.constant 0 : index
    %c0_5 = arith.constant 0 : index
    %4 = vector.load %arg3[%c0_4, %c0_5] : memref<1x256xf32, #tpu.memory_space<vmem>>, vector<1x256xf32>
    %5 = vector.broadcast %4 : vector<1x256xf32> to vector<64x256xf32>
    %6 = arith.addf %3, %5 : vector<64x256xf32>
    %7 = vector.shape_cast %6 : vector<64x256xf32> to vector<8x8x256xf32>
    %c0_6 = arith.constant 0 : index
    %c0_7 = arith.constant 0 : index
    %c0_8 = arith.constant 0 : index
    %8 = vector.load %arg8[%c0_6, %c0_7, %c0_8] : memref<8x8x256xf32, #tpu.memory_space<vmem>>, vector<8x8x256xf32>
    tpu.vector_store %arg8[%c0_6, %c0_7, %c0_8], %7 {strides = array<i32>} : memref<8x8x256xf32, #tpu.memory_space<vmem>>, vector<8x8x256xf32>,
    %c0_9 = arith.constant 0 : index
    %c0_10 = arith.constant 0 : index
    %9 = vector.load %arg4[%c0_9, %c0_10] : memref<64x256xf32, #tpu.memory_space<vmem>>, vector<64x256xf32>
    %c0_11 = arith.constant 0 : index
    %c0_12 = arith.constant 0 : index
    %10 = vector.load %arg1[%c0_11, %c0_12] : memref<1x64xi32, #tpu.memory_space<vmem>>, vector<1x64xi32>
    %cst_13 = arith.constant 0.000000e+00 : f32
    %11 = vector.broadcast %cst_13 : f32 to vector<8x64xf32>
    %cst_14 = arith.constant 0.000000e+00 : f32
    %12 = vector.broadcast %cst_14 : f32 to vector<8x64xf32>
    %c0_i32 = arith.constant 0 : i32
    %c7_i32 = arith.constant 7 : i32
    %13 = arith.minsi %c0_i32, %c7_i32 : i32
    %14 = arith.index_cast %13 : i32 to index
    %c0_15 = arith.constant 0 : index
    %c0_16 = arith.constant 0 : index
    %15 = vector.load %arg8[%14, %c0_15, %c0_16] : memref<8x8x256xf32, #tpu.memory_space<vmem>>, vector<1x8x256xf32>
    %16 = vector.shape_cast %15 : vector<1x8x256xf32> to vector<8x256xf32>
    %cst_17 = arith.constant dense<0.000000e+00> : vector<8x256xf32>
    %17 = tpu.matmul %11, %9, %cst_17 {dimension_numbers = #tpu.dot_dimension_numbers<[1], [0], [0], [1], [0, 0, 1, 1], [], []>} : vector<8x64xf32>, vector<64x256xf32>, vector<8x256xf32> -> vector<8x256xf32>
    %18 = arith.addf %16, %17 : vector<8x256xf32>
    %19 = math.tanh %18 : vector<8x256xf32>
    %cst_18 = arith.constant 5.000000e-01 : f32
    %20 = vector.broadcast %cst_18 : f32 to vector<8x256xf32>
    %21 = arith.mulf %20, %19 : vector<8x256xf32>
    %cst_19 = arith.constant 5.000000e-01 : f32
    %22 = vector.broadcast %cst_19 : f32 to vector<8x256xf32>
    %23 = arith.addf %21, %22 : vector<8x256xf32>
    %24 = vector.extract_strided_slice %23 {offsets = [0, 0], sizes = [8, 64], strides = [1, 1]} : vector<8x256xf32> to vector<8x64xf32>
    %25 = vector.extract_strided_slice %23 {offsets = [0, 64], sizes = [8, 64], strides = [1, 1]} : vector<8x256xf32> to vector<8x64xf32>
    %26 = vector.extract_strided_slice %19 {offsets = [0, 128], sizes = [8, 64], strides = [1, 1]} : vector<8x256xf32> to vector<8x64xf32>
    %27 = vector.extract_strided_slice %23 {offsets = [0, 192], sizes = [8, 64], strides = [1, 1]} : vector<8x256xf32> to vector<8x64xf32>
    %28 = arith.mulf %25, %12 : vector<8x64xf32>
    %29 = arith.mulf %24, %26 : vector<8x64xf32>
    %30 = arith.addf %28, %29 : vector<8x64xf32>
    %31 = math.tanh %30 : vector<8x64xf32>
    %32 = arith.mulf %27, %31 : vector<8x64xf32>
    %33 = vector.broadcast %c0_i32 : i32 to vector<1x64xi32>
    %34 = arith.subi %33, %10 : vector<1x64xi32>
    %c0_i32_20 = arith.constant 0 : i32
    %35 = vector.broadcast %c0_i32_20 : i32 to vector<1x64xi32>
    %36 = arith.cmpi sge, %34, %35 : vector<1x64xi32>
    %c8_i32 = arith.constant 8 : i32
    %37 = vector.broadcast %c8_i32 : i32 to vector<1x64xi32>
    %38 = arith.cmpi slt, %34, %37 : vector<1x64xi32>
    %39 = arith.andi %36, %38 : vector<1x64xi1>
    %40 = vector.shape_cast %39 : vector<1x64xi1> to vector<1x64xi1>
    %41 = vector.broadcast %40 : vector<1x64xi1> to vector<8x64xi1>
    %42 = arith.select %41, %32, %11 : vector<8x64xi1>, vector<8x64xf32>
    %43 = vector.shape_cast %39 : vector<1x64xi1> to vector<1x64xi1>
    %44 = vector.broadcast %43 : vector<1x64xi1> to vector<8x64xi1>
    %45 = arith.select %44, %30, %12 : vector<8x64xi1>, vector<8x64xf32>
    %c1_i32 = arith.constant 1 : i32
    %c7_i32_21 = arith.constant 7 : i32
    %46 = arith.minsi %c1_i32, %c7_i32_21 : i32
    %47 = arith.index_cast %46 : i32 to index
    %c0_22 = arith.constant 0 : index
    %c0_23 = arith.constant 0 : index
    %48 = vector.load %arg8[%47, %c0_22, %c0_23] : memref<8x8x256xf32, #tpu.memory_space<vmem>>, vector<1x8x256xf32>
    %49 = vector.shape_cast %48 : vector<1x8x256xf32> to vector<8x256xf32>
    %cst_24 = arith.constant dense<0.000000e+00> : vector<8x256xf32>
    %50 = tpu.matmul %42, %9, %cst_24 {dimension_numbers = #tpu.dot_dimension_numbers<[1], [0], [0], [1], [0, 0, 1, 1], [], []>} : vector<8x64xf32>, vector<64x256xf32>, vector<8x256xf32> -> vector<8x256xf32>
    %51 = arith.addf %49, %50 : vector<8x256xf32>
    %52 = math.tanh %51 : vector<8x256xf32>
    %cst_25 = arith.constant 5.000000e-01 : f32
    %53 = vector.broadcast %cst_25 : f32 to vector<8x256xf32>
    %54 = arith.mulf %53, %52 : vector<8x256xf32>
    %cst_26 = arith.constant 5.000000e-01 : f32
    %55 = vector.broadcast %cst_26 : f32 to vector<8x256xf32>
    %56 = arith.addf %54, %55 : vector<8x256xf32>
    %57 = vector.extract_strided_slice %56 {offsets = [0, 0], sizes = [8, 64], strides = [1, 1]} : vector<8x256xf32> to vector<8x64xf32>
    %58 = vector.extract_strided_slice %56 {offsets = [0, 64], sizes = [8, 64], strides = [1, 1]} : vector<8x256xf32> to vector<8x64xf32>
    %59 = vector.extract_strided_slice %52 {offsets = [0, 128], sizes = [8, 64], strides = [1, 1]} : vector<8x256xf32> to vector<8x64xf32>
    %60 = vector.extract_strided_slice %56 {offsets = [0, 192], sizes = [8, 64], strides = [1, 1]} : vector<8x256xf32> to vector<8x64xf32>
    %61 = arith.mulf %58, %45 : vector<8x64xf32>
    %62 = arith.mulf %57, %59 : vector<8x64xf32>
    %63 = arith.addf %61, %62 : vector<8x64xf32>
    %64 = math.tanh %63 : vector<8x64xf32>
    %65 = arith.mulf %60, %64 : vector<8x64xf32>
    %66 = vector.broadcast %c1_i32 : i32 to vector<1x64xi32>
    %67 = arith.subi %66, %10 : vector<1x64xi32>
    %c0_i32_27 = arith.constant 0 : i32
    %68 = vector.broadcast %c0_i32_27 : i32 to vector<1x64xi32>
    %69 = arith.cmpi sge, %67, %68 : vector<1x64xi32>
    %c8_i32_28 = arith.constant 8 : i32
    %70 = vector.broadcast %c8_i32_28 : i32 to vector<1x64xi32>
    %71 = arith.cmpi slt, %67, %70 : vector<1x64xi32>
    %72 = arith.andi %69, %71 : vector<1x64xi1>
    %73 = vector.shape_cast %72 : vector<1x64xi1> to vector<1x64xi1>
    %74 = vector.broadcast %73 : vector<1x64xi1> to vector<8x64xi1>
    %75 = arith.select %74, %65, %42 : vector<8x64xi1>, vector<8x64xf32>
    %76 = vector.shape_cast %72 : vector<1x64xi1> to vector<1x64xi1>
    %77 = vector.broadcast %76 : vector<1x64xi1> to vector<8x64xi1>
    %78 = arith.select %77, %63, %45 : vector<8x64xi1>, vector<8x64xf32>
    %c2_i32 = arith.constant 2 : i32
    %c7_i32_29 = arith.constant 7 : i32
    %79 = arith.minsi %c2_i32, %c7_i32_29 : i32
    %80 = arith.index_cast %79 : i32 to index
    %c0_30 = arith.constant 0 : index
    %c0_31 = arith.constant 0 : index
    %81 = vector.load %arg8[%80, %c0_30, %c0_31] : memref<8x8x256xf32, #tpu.memory_space<vmem>>, vector<1x8x256xf32>
    %82 = vector.shape_cast %81 : vector<1x8x256xf32> to vector<8x256xf32>
    %cst_32 = arith.constant dense<0.000000e+00> : vector<8x256xf32>
    %83 = tpu.matmul %75, %9, %cst_32 {dimension_numbers = #tpu.dot_dimension_numbers<[1], [0], [0], [1], [0, 0, 1, 1], [], []>} : vector<8x64xf32>, vector<64x256xf32>, vector<8x256xf32> -> vector<8x256xf32>
    %84 = arith.addf %82, %83 : vector<8x256xf32>
    %85 = math.tanh %84 : vector<8x256xf32>
    %cst_33 = arith.constant 5.000000e-01 : f32
    %86 = vector.broadcast %cst_33 : f32 to vector<8x256xf32>
    %87 = arith.mulf %86, %85 : vector<8x256xf32>
    %cst_34 = arith.constant 5.000000e-01 : f32
    %88 = vector.broadcast %cst_34 : f32 to vector<8x256xf32>
    %89 = arith.addf %87, %88 : vector<8x256xf32>
    %90 = vector.extract_strided_slice %89 {offsets = [0, 0], sizes = [8, 64], strides = [1, 1]} : vector<8x256xf32> to vector<8x64xf32>
    %91 = vector.extract_strided_slice %89 {offsets = [0, 64], sizes = [8, 64], strides = [1, 1]} : vector<8x256xf32> to vector<8x64xf32>
    %92 = vector.extract_strided_slice %85 {offsets = [0, 128], sizes = [8, 64], strides = [1, 1]} : vector<8x256xf32> to vector<8x64xf32>
    %93 = vector.extract_strided_slice %89 {offsets = [0, 192], sizes = [8, 64], strides = [1, 1]} : vector<8x256xf32> to vector<8x64xf32>
    %94 = arith.mulf %91, %78 : vector<8x64xf32>
    %95 = arith.mulf %90, %92 : vector<8x64xf32>
    %96 = arith.addf %94, %95 : vector<8x64xf32>
    %97 = math.tanh %96 : vector<8x64xf32>
    %98 = arith.mulf %93, %97 : vector<8x64xf32>
    %99 = vector.broadcast %c2_i32 : i32 to vector<1x64xi32>
    %100 = arith.subi %99, %10 : vector<1x64xi32>
    %c0_i32_35 = arith.constant 0 : i32
    %101 = vector.broadcast %c0_i32_35 : i32 to vector<1x64xi32>
    %102 = arith.cmpi sge, %100, %101 : vector<1x64xi32>
    %c8_i32_36 = arith.constant 8 : i32
    %103 = vector.broadcast %c8_i32_36 : i32 to vector<1x64xi32>
    %104 = arith.cmpi slt, %100, %103 : vector<1x64xi32>
    %105 = arith.andi %102, %104 : vector<1x64xi1>
    %106 = vector.shape_cast %105 : vector<1x64xi1> to vector<1x64xi1>
    %107 = vector.broadcast %106 : vector<1x64xi1> to vector<8x64xi1>
    %108 = arith.select %107, %98, %75 : vector<8x64xi1>, vector<8x64xf32>
    %109 = vector.shape_cast %105 : vector<1x64xi1> to vector<1x64xi1>
    %110 = vector.broadcast %109 : vector<1x64xi1> to vector<8x64xi1>
    %111 = arith.select %110, %96, %78 : vector<8x64xi1>, vector<8x64xf32>
    %c3_i32 = arith.constant 3 : i32
    %c7_i32_37 = arith.constant 7 : i32
    %112 = arith.minsi %c3_i32, %c7_i32_37 : i32
    %113 = arith.index_cast %112 : i32 to index
    %c0_38 = arith.constant 0 : index
    %c0_39 = arith.constant 0 : index
    %114 = vector.load %arg8[%113, %c0_38, %c0_39] : memref<8x8x256xf32, #tpu.memory_space<vmem>>, vector<1x8x256xf32>
    %115 = vector.shape_cast %114 : vector<1x8x256xf32> to vector<8x256xf32>
    %cst_40 = arith.constant dense<0.000000e+00> : vector<8x256xf32>
    %116 = tpu.matmul %108, %9, %cst_40 {dimension_numbers = #tpu.dot_dimension_numbers<[1], [0], [0], [1], [0, 0, 1, 1], [], []>} : vector<8x64xf32>, vector<64x256xf32>, vector<8x256xf32> -> vector<8x256xf32>
    %117 = arith.addf %115, %116 : vector<8x256xf32>
    %118 = math.tanh %117 : vector<8x256xf32>
    %cst_41 = arith.constant 5.000000e-01 : f32
    %119 = vector.broadcast %cst_41 : f32 to vector<8x256xf32>
    %120 = arith.mulf %119, %118 : vector<8x256xf32>
    %cst_42 = arith.constant 5.000000e-01 : f32
    %121 = vector.broadcast %cst_42 : f32 to vector<8x256xf32>
    %122 = arith.addf %120, %121 : vector<8x256xf32>
    %123 = vector.extract_strided_slice %122 {offsets = [0, 0], sizes = [8, 64], strides = [1, 1]} : vector<8x256xf32> to vector<8x64xf32>
    %124 = vector.extract_strided_slice %122 {offsets = [0, 64], sizes = [8, 64], strides = [1, 1]} : vector<8x256xf32> to vector<8x64xf32>
    %125 = vector.extract_strided_slice %118 {offsets = [0, 128], sizes = [8, 64], strides = [1, 1]} : vector<8x256xf32> to vector<8x64xf32>
    %126 = vector.extract_strided_slice %122 {offsets = [0, 192], sizes = [8, 64], strides = [1, 1]} : vector<8x256xf32> to vector<8x64xf32>
    %127 = arith.mulf %124, %111 : vector<8x64xf32>
    %128 = arith.mulf %123, %125 : vector<8x64xf32>
    %129 = arith.addf %127, %128 : vector<8x64xf32>
    %130 = math.tanh %129 : vector<8x64xf32>
    %131 = arith.mulf %126, %130 : vector<8x64xf32>
    %132 = vector.broadcast %c3_i32 : i32 to vector<1x64xi32>
    %133 = arith.subi %132, %10 : vector<1x64xi32>
    %c0_i32_43 = arith.constant 0 : i32
    %134 = vector.broadcast %c0_i32_43 : i32 to vector<1x64xi32>
    %135 = arith.cmpi sge, %133, %134 : vector<1x64xi32>
    %c8_i32_44 = arith.constant 8 : i32
    %136 = vector.broadcast %c8_i32_44 : i32 to vector<1x64xi32>
    %137 = arith.cmpi slt, %133, %136 : vector<1x64xi32>
    %138 = arith.andi %135, %137 : vector<1x64xi1>
    %139 = vector.shape_cast %138 : vector<1x64xi1> to vector<1x64xi1>
    %140 = vector.broadcast %139 : vector<1x64xi1> to vector<8x64xi1>
    %141 = arith.select %140, %131, %108 : vector<8x64xi1>, vector<8x64xf32>
    %142 = vector.shape_cast %138 : vector<1x64xi1> to vector<1x64xi1>
    %143 = vector.broadcast %142 : vector<1x64xi1> to vector<8x64xi1>
    %144 = arith.select %143, %129, %111 : vector<8x64xi1>, vector<8x64xf32>
    %c4_i32 = arith.constant 4 : i32
    %c7_i32_45 = arith.constant 7 : i32
    %145 = arith.minsi %c4_i32, %c7_i32_45 : i32
    %146 = arith.index_cast %145 : i32 to index
    %c0_46 = arith.constant 0 : index
    %c0_47 = arith.constant 0 : index
    %147 = vector.load %arg8[%146, %c0_46, %c0_47] : memref<8x8x256xf32, #tpu.memory_space<vmem>>, vector<1x8x256xf32>
    %148 = vector.shape_cast %147 : vector<1x8x256xf32> to vector<8x256xf32>
    %cst_48 = arith.constant dense<0.000000e+00> : vector<8x256xf32>
    %149 = tpu.matmul %141, %9, %cst_48 {dimension_numbers = #tpu.dot_dimension_numbers<[1], [0], [0], [1], [0, 0, 1, 1], [], []>} : vector<8x64xf32>, vector<64x256xf32>, vector<8x256xf32> -> vector<8x256xf32>
    %150 = arith.addf %148, %149 : vector<8x256xf32>
    %151 = math.tanh %150 : vector<8x256xf32>
    %cst_49 = arith.constant 5.000000e-01 : f32
    %152 = vector.broadcast %cst_49 : f32 to vector<8x256xf32>
    %153 = arith.mulf %152, %151 : vector<8x256xf32>
    %cst_50 = arith.constant 5.000000e-01 : f32
    %154 = vector.broadcast %cst_50 : f32 to vector<8x256xf32>
    %155 = arith.addf %153, %154 : vector<8x256xf32>
    %156 = vector.extract_strided_slice %155 {offsets = [0, 0], sizes = [8, 64], strides = [1, 1]} : vector<8x256xf32> to vector<8x64xf32>
    %157 = vector.extract_strided_slice %155 {offsets = [0, 64], sizes = [8, 64], strides = [1, 1]} : vector<8x256xf32> to vector<8x64xf32>
    %158 = vector.extract_strided_slice %151 {offsets = [0, 128], sizes = [8, 64], strides = [1, 1]} : vector<8x256xf32> to vector<8x64xf32>
    %159 = vector.extract_strided_slice %155 {offsets = [0, 192], sizes = [8, 64], strides = [1, 1]} : vector<8x256xf32> to vector<8x64xf32>
    %160 = arith.mulf %157, %144 : vector<8x64xf32>
    %161 = arith.mulf %156, %158 : vector<8x64xf32>
    %162 = arith.addf %160, %161 : vector<8x64xf32>
    %163 = math.tanh %162 : vector<8x64xf32>
    %164 = arith.mulf %159, %163 : vector<8x64xf32>
    %165 = vector.broadcast %c4_i32 : i32 to vector<1x64xi32>
    %166 = arith.subi %165, %10 : vector<1x64xi32>
    %c0_i32_51 = arith.constant 0 : i32
    %167 = vector.broadcast %c0_i32_51 : i32 to vector<1x64xi32>
    %168 = arith.cmpi sge, %166, %167 : vector<1x64xi32>
    %c8_i32_52 = arith.constant 8 : i32
    %169 = vector.broadcast %c8_i32_52 : i32 to vector<1x64xi32>
    %170 = arith.cmpi slt, %166, %169 : vector<1x64xi32>
    %171 = arith.andi %168, %170 : vector<1x64xi1>
    %172 = vector.shape_cast %171 : vector<1x64xi1> to vector<1x64xi1>
    %173 = vector.broadcast %172 : vector<1x64xi1> to vector<8x64xi1>
    %174 = arith.select %173, %164, %141 : vector<8x64xi1>, vector<8x64xf32>
    %175 = vector.shape_cast %171 : vector<1x64xi1> to vector<1x64xi1>
    %176 = vector.broadcast %175 : vector<1x64xi1> to vector<8x64xi1>
    %177 = arith.select %176, %162, %144 : vector<8x64xi1>, vector<8x64xf32>
    %c5_i32 = arith.constant 5 : i32
    %c7_i32_53 = arith.constant 7 : i32
    %178 = arith.minsi %c5_i32, %c7_i32_53 : i32
    %179 = arith.index_cast %178 : i32 to index
    %c0_54 = arith.constant 0 : index
    %c0_55 = arith.constant 0 : index
    %180 = vector.load %arg8[%179, %c0_54, %c0_55] : memref<8x8x256xf32, #tpu.memory_space<vmem>>, vector<1x8x256xf32>
    %181 = vector.shape_cast %180 : vector<1x8x256xf32> to vector<8x256xf32>
    %cst_56 = arith.constant dense<0.000000e+00> : vector<8x256xf32>
    %182 = tpu.matmul %174, %9, %cst_56 {dimension_numbers = #tpu.dot_dimension_numbers<[1], [0], [0], [1], [0, 0, 1, 1], [], []>} : vector<8x64xf32>, vector<64x256xf32>, vector<8x256xf32> -> vector<8x256xf32>
    %183 = arith.addf %181, %182 : vector<8x256xf32>
    %184 = math.tanh %183 : vector<8x256xf32>
    %cst_57 = arith.constant 5.000000e-01 : f32
    %185 = vector.broadcast %cst_57 : f32 to vector<8x256xf32>
    %186 = arith.mulf %185, %184 : vector<8x256xf32>
    %cst_58 = arith.constant 5.000000e-01 : f32
    %187 = vector.broadcast %cst_58 : f32 to vector<8x256xf32>
    %188 = arith.addf %186, %187 : vector<8x256xf32>
    %189 = vector.extract_strided_slice %188 {offsets = [0, 0], sizes = [8, 64], strides = [1, 1]} : vector<8x256xf32> to vector<8x64xf32>
    %190 = vector.extract_strided_slice %188 {offsets = [0, 64], sizes = [8, 64], strides = [1, 1]} : vector<8x256xf32> to vector<8x64xf32>
    %191 = vector.extract_strided_slice %184 {offsets = [0, 128], sizes = [8, 64], strides = [1, 1]} : vector<8x256xf32> to vector<8x64xf32>
    %192 = vector.extract_strided_slice %188 {offsets = [0, 192], sizes = [8, 64], strides = [1, 1]} : vector<8x256xf32> to vector<8x64xf32>
    %193 = arith.mulf %190, %177 : vector<8x64xf32>
    %194 = arith.mulf %189, %191 : vector<8x64xf32>
    %195 = arith.addf %193, %194 : vector<8x64xf32>
    %196 = math.tanh %195 : vector<8x64xf32>
    %197 = arith.mulf %192, %196 : vector<8x64xf32>
    %198 = vector.broadcast %c5_i32 : i32 to vector<1x64xi32>
    %199 = arith.subi %198, %10 : vector<1x64xi32>
    %c0_i32_59 = arith.constant 0 : i32
    %200 = vector.broadcast %c0_i32_59 : i32 to vector<1x64xi32>
    %201 = arith.cmpi sge, %199, %200 : vector<1x64xi32>
    %c8_i32_60 = arith.constant 8 : i32
    %202 = vector.broadcast %c8_i32_60 : i32 to vector<1x64xi32>
    %203 = arith.cmpi slt, %199, %202 : vector<1x64xi32>
    %204 = arith.andi %201, %203 : vector<1x64xi1>
    %205 = vector.shape_cast %204 : vector<1x64xi1> to vector<1x64xi1>
    %206 = vector.broadcast %205 : vector<1x64xi1> to vector<8x64xi1>
    %207 = arith.select %206, %197, %174 : vector<8x64xi1>, vector<8x64xf32>
    %208 = vector.shape_cast %204 : vector<1x64xi1> to vector<1x64xi1>
    %209 = vector.broadcast %208 : vector<1x64xi1> to vector<8x64xi1>
    %210 = arith.select %209, %195, %177 : vector<8x64xi1>, vector<8x64xf32>
    %c6_i32 = arith.constant 6 : i32
    %c7_i32_61 = arith.constant 7 : i32
    %211 = arith.minsi %c6_i32, %c7_i32_61 : i32
    %212 = arith.index_cast %211 : i32 to index
    %c0_62 = arith.constant 0 : index
    %c0_63 = arith.constant 0 : index
    %213 = vector.load %arg8[%212, %c0_62, %c0_63] : memref<8x8x256xf32, #tpu.memory_space<vmem>>, vector<1x8x256xf32>
    %214 = vector.shape_cast %213 : vector<1x8x256xf32> to vector<8x256xf32>
    %cst_64 = arith.constant dense<0.000000e+00> : vector<8x256xf32>
    %215 = tpu.matmul %207, %9, %cst_64 {dimension_numbers = #tpu.dot_dimension_numbers<[1], [0], [0], [1], [0, 0, 1, 1], [], []>} : vector<8x64xf32>, vector<64x256xf32>, vector<8x256xf32> -> vector<8x256xf32>
    %216 = arith.addf %214, %215 : vector<8x256xf32>
    %217 = math.tanh %216 : vector<8x256xf32>
    %cst_65 = arith.constant 5.000000e-01 : f32
    %218 = vector.broadcast %cst_65 : f32 to vector<8x256xf32>
    %219 = arith.mulf %218, %217 : vector<8x256xf32>
    %cst_66 = arith.constant 5.000000e-01 : f32
    %220 = vector.broadcast %cst_66 : f32 to vector<8x256xf32>
    %221 = arith.addf %219, %220 : vector<8x256xf32>
    %222 = vector.extract_strided_slice %221 {offsets = [0, 0], sizes = [8, 64], strides = [1, 1]} : vector<8x256xf32> to vector<8x64xf32>
    %223 = vector.extract_strided_slice %221 {offsets = [0, 64], sizes = [8, 64], strides = [1, 1]} : vector<8x256xf32> to vector<8x64xf32>
    %224 = vector.extract_strided_slice %217 {offsets = [0, 128], sizes = [8, 64], strides = [1, 1]} : vector<8x256xf32> to vector<8x64xf32>
    %225 = vector.extract_strided_slice %221 {offsets = [0, 192], sizes = [8, 64], strides = [1, 1]} : vector<8x256xf32> to vector<8x64xf32>
    %226 = arith.mulf %223, %210 : vector<8x64xf32>
    %227 = arith.mulf %222, %224 : vector<8x64xf32>
    %228 = arith.addf %226, %227 : vector<8x64xf32>
    %229 = math.tanh %228 : vector<8x64xf32>
    %230 = arith.mulf %225, %229 : vector<8x64xf32>
    %231 = vector.broadcast %c6_i32 : i32 to vector<1x64xi32>
    %232 = arith.subi %231, %10 : vector<1x64xi32>
    %c0_i32_67 = arith.constant 0 : i32
    %233 = vector.broadcast %c0_i32_67 : i32 to vector<1x64xi32>
    %234 = arith.cmpi sge, %232, %233 : vector<1x64xi32>
    %c8_i32_68 = arith.constant 8 : i32
    %235 = vector.broadcast %c8_i32_68 : i32 to vector<1x64xi32>
    %236 = arith.cmpi slt, %232, %235 : vector<1x64xi32>
    %237 = arith.andi %234, %236 : vector<1x64xi1>
    %238 = vector.shape_cast %237 : vector<1x64xi1> to vector<1x64xi1>
    %239 = vector.broadcast %238 : vector<1x64xi1> to vector<8x64xi1>
    %240 = arith.select %239, %230, %207 : vector<8x64xi1>, vector<8x64xf32>
    %241 = vector.shape_cast %237 : vector<1x64xi1> to vector<1x64xi1>
    %242 = vector.broadcast %241 : vector<1x64xi1> to vector<8x64xi1>
    %243 = arith.select %242, %228, %210 : vector<8x64xi1>, vector<8x64xf32>
    %c7_i32_69 = arith.constant 7 : i32
    %c7_i32_70 = arith.constant 7 : i32
    %244 = arith.minsi %c7_i32_69, %c7_i32_70 : i32
    %245 = arith.index_cast %244 : i32 to index
    %c0_71 = arith.constant 0 : index
    %c0_72 = arith.constant 0 : index
    %246 = vector.load %arg8[%245, %c0_71, %c0_72] : memref<8x8x256xf32, #tpu.memory_space<vmem>>, vector<1x8x256xf32>
    %247 = vector.shape_cast %246 : vector<1x8x256xf32> to vector<8x256xf32>
    %cst_73 = arith.constant dense<0.000000e+00> : vector<8x256xf32>
    %248 = tpu.matmul %240, %9, %cst_73 {dimension_numbers = #tpu.dot_dimension_numbers<[1], [0], [0], [1], [0, 0, 1, 1], [], []>} : vector<8x64xf32>, vector<64x256xf32>, vector<8x256xf32> -> vector<8x256xf32>
    %249 = arith.addf %247, %248 : vector<8x256xf32>
    %250 = math.tanh %249 : vector<8x256xf32>
    %cst_74 = arith.constant 5.000000e-01 : f32
    %251 = vector.broadcast %cst_74 : f32 to vector<8x256xf32>
    %252 = arith.mulf %251, %250 : vector<8x256xf32>
    %cst_75 = arith.constant 5.000000e-01 : f32
    %253 = vector.broadcast %cst_75 : f32 to vector<8x256xf32>
    %254 = arith.addf %252, %253 : vector<8x256xf32>
    %255 = vector.extract_strided_slice %254 {offsets = [0, 0], sizes = [8, 64], strides = [1, 1]} : vector<8x256xf32> to vector<8x64xf32>
    %256 = vector.extract_strided_slice %254 {offsets = [0, 64], sizes = [8, 64], strides = [1, 1]} : vector<8x256xf32> to vector<8x64xf32>
    %257 = vector.extract_strided_slice %250 {offsets = [0, 128], sizes = [8, 64], strides = [1, 1]} : vector<8x256xf32> to vector<8x64xf32>
    %258 = vector.extract_strided_slice %254 {offsets = [0, 192], sizes = [8, 64], strides = [1, 1]} : vector<8x256xf32> to vector<8x64xf32>
    %259 = arith.mulf %256, %243 : vector<8x64xf32>
    %260 = arith.mulf %255, %257 : vector<8x64xf32>
    %261 = arith.addf %259, %260 : vector<8x64xf32>
    %262 = math.tanh %261 : vector<8x64xf32>
    %263 = arith.mulf %258, %262 : vector<8x64xf32>
    %264 = vector.broadcast %c7_i32_69 : i32 to vector<1x64xi32>
    %265 = arith.subi %264, %10 : vector<1x64xi32>
    %c0_i32_76 = arith.constant 0 : i32
    %266 = vector.broadcast %c0_i32_76 : i32 to vector<1x64xi32>
    %267 = arith.cmpi sge, %265, %266 : vector<1x64xi32>
    %c8_i32_77 = arith.constant 8 : i32
    %268 = vector.broadcast %c8_i32_77 : i32 to vector<1x64xi32>
    %269 = arith.cmpi slt, %265, %268 : vector<1x64xi32>
    %270 = arith.andi %267, %269 : vector<1x64xi1>
    %271 = vector.shape_cast %270 : vector<1x64xi1> to vector<1x64xi1>
    %272 = vector.broadcast %271 : vector<1x64xi1> to vector<8x64xi1>
    %273 = arith.select %272, %263, %240 : vector<8x64xi1>, vector<8x64xf32>
    %274 = vector.shape_cast %270 : vector<1x64xi1> to vector<1x64xi1>
    %275 = vector.broadcast %274 : vector<1x64xi1> to vector<8x64xi1>
    %276 = arith.select %275, %261, %243 : vector<8x64xi1>, vector<8x64xf32>
    %c8_i32_78 = arith.constant 8 : i32
    %c7_i32_79 = arith.constant 7 : i32
    %277 = arith.minsi %c8_i32_78, %c7_i32_79 : i32
    %278 = arith.index_cast %277 : i32 to index
    %c0_80 = arith.constant 0 : index
    %c0_81 = arith.constant 0 : index
    %279 = vector.load %arg8[%278, %c0_80, %c0_81] : memref<8x8x256xf32, #tpu.memory_space<vmem>>, vector<1x8x256xf32>
    %280 = vector.shape_cast %279 : vector<1x8x256xf32> to vector<8x256xf32>
    %cst_82 = arith.constant dense<0.000000e+00> : vector<8x256xf32>
    %281 = tpu.matmul %273, %9, %cst_82 {dimension_numbers = #tpu.dot_dimension_numbers<[1], [0], [0], [1], [0, 0, 1, 1], [], []>} : vector<8x64xf32>, vector<64x256xf32>, vector<8x256xf32> -> vector<8x256xf32>
    %282 = arith.addf %280, %281 : vector<8x256xf32>
    %283 = math.tanh %282 : vector<8x256xf32>
    %cst_83 = arith.constant 5.000000e-01 : f32
    %284 = vector.broadcast %cst_83 : f32 to vector<8x256xf32>
    %285 = arith.mulf %284, %283 : vector<8x256xf32>
    %cst_84 = arith.constant 5.000000e-01 : f32
    %286 = vector.broadcast %cst_84 : f32 to vector<8x256xf32>
    %287 = arith.addf %285, %286 : vector<8x256xf32>
    %288 = vector.extract_strided_slice %287 {offsets = [0, 0], sizes = [8, 64], strides = [1, 1]} : vector<8x256xf32> to vector<8x64xf32>
    %289 = vector.extract_strided_slice %287 {offsets = [0, 64], sizes = [8, 64], strides = [1, 1]} : vector<8x256xf32> to vector<8x64xf32>
    %290 = vector.extract_strided_slice %283 {offsets = [0, 128], sizes = [8, 64], strides = [1, 1]} : vector<8x256xf32> to vector<8x64xf32>
    %291 = vector.extract_strided_slice %287 {offsets = [0, 192], sizes = [8, 64], strides = [1, 1]} : vector<8x256xf32> to vector<8x64xf32>
    %292 = arith.mulf %289, %276 : vector<8x64xf32>
    %293 = arith.mulf %288, %290 : vector<8x64xf32>
    %294 = arith.addf %292, %293 : vector<8x64xf32>
    %295 = math.tanh %294 : vector<8x64xf32>
    %296 = arith.mulf %291, %295 : vector<8x64xf32>
    %297 = vector.broadcast %c8_i32_78 : i32 to vector<1x64xi32>
    %298 = arith.subi %297, %10 : vector<1x64xi32>
    %c0_i32_85 = arith.constant 0 : i32
    %299 = vector.broadcast %c0_i32_85 : i32 to vector<1x64xi32>
    %300 = arith.cmpi sge, %298, %299 : vector<1x64xi32>
    %c8_i32_86 = arith.constant 8 : i32
    %301 = vector.broadcast %c8_i32_86 : i32 to vector<1x64xi32>
    %302 = arith.cmpi slt, %298, %301 : vector<1x64xi32>
    %303 = arith.andi %300, %302 : vector<1x64xi1>
    %304 = vector.shape_cast %303 : vector<1x64xi1> to vector<1x64xi1>
    %305 = vector.broadcast %304 : vector<1x64xi1> to vector<8x64xi1>
    %306 = arith.select %305, %296, %273 : vector<8x64xi1>, vector<8x64xf32>
    %307 = vector.shape_cast %303 : vector<1x64xi1> to vector<1x64xi1>
    %308 = vector.broadcast %307 : vector<1x64xi1> to vector<8x64xi1>
    %309 = arith.select %308, %294, %276 : vector<8x64xi1>, vector<8x64xf32>
    %c9_i32 = arith.constant 9 : i32
    %310 = vector.extract_strided_slice %306 {offsets = [0, 32], sizes = [8, 32], strides = [1, 1]} : vector<8x64xf32> to vector<8x32xf32>
    %c0_87 = arith.constant 0 : index
    %c0_88 = arith.constant 0 : index
    %311 = vector.load %arg5[%c0_87, %c0_88] : memref<32x2xf32, #tpu.memory_space<vmem>>, vector<32x2xf32>
    %cst_89 = arith.constant dense<0.000000e+00> : vector<8x2xf32>
    %312 = tpu.matmul %310, %311, %cst_89 {dimension_numbers = #tpu.dot_dimension_numbers<[1], [0], [0], [1], [0, 0, 1, 1], [], []>} : vector<8x32xf32>, vector<32x2xf32>, vector<8x2xf32> -> vector<8x2xf32>
    %c0_90 = arith.constant 0 : index
    %c0_91 = arith.constant 0 : index
    %313 = vector.load %arg6[%c0_90, %c0_91] : memref<1x2xf32, #tpu.memory_space<vmem>>, vector<1x2xf32>
    %314 = vector.broadcast %313 : vector<1x2xf32> to vector<8x2xf32>
    %315 = arith.addf %312, %314 : vector<8x2xf32>
    %c0_92 = arith.constant 0 : index
    %c0_93 = arith.constant 0 : index
    %316 = vector.load %arg7[%c0_92, %c0_93] : memref<8x2xf32, #tpu.memory_space<vmem>>, vector<8x2xf32>
    tpu.vector_store %arg7[%c0_92, %c0_93], %315 {strides = array<i32>} : memref<8x2xf32, #tpu.memory_space<vmem>>, vector<8x2xf32>,
    return
  }
}

</mosaic_0001>

<llo_original>
// kernel: lstm_model_forward.1
$region0: #{lstm_model_forward.1}
  #allocation0 [shape = 'u32[]', space=smem, size = 0x4, offset = 0x4, fixed_abs, tag = 'smem constant byte address 0x4 - core index']
  #allocation1 [shape = 'u32[144,128]{1,0:T(1,128)}', space=vmem, size = 0x12000, scoped, tag = 'internal scratch']
  #allocation2 [shape = 'f32[8,8,256]{2,1,0:T(8,128)}', space=vmem, size = 0x10000, scoped, tag = 'scratch operand']
  %s0 = inlined_call_operand.vmem [shape: f32[8,8,16], index: 0, kind: input, shape index: {}]
  %s1 = inlined_call_operand.vmem [shape: s32[1,64], index: 1, kind: input, shape index: {}]
  %s2 = inlined_call_operand.vmem [shape: f32[16,256], index: 2, kind: input, shape index: {}]
  %s3 = inlined_call_operand.vmem [shape: f32[1,256], index: 3, kind: input, shape index: {}]
  %s4 = inlined_call_operand.vmem [shape: f32[64,256], index: 4, kind: input, shape index: {}]
  %s5 = inlined_call_operand.vmem [shape: f32[32,2], index: 5, kind: input, shape index: {}]
  %s6 = inlined_call_operand.vmem [shape: f32[1,2], index: 6, kind: input, shape index: {}]
  %s7 = inlined_call_operand.vmem [shape: f32[8,2], index: 7, kind: output, shape index: {}]
  %s8 = sld [smem:[#allocation0]]
  $region38: #{lstm_model_forward.1} parent=0
    _
  %s10 = ssub.s32 1, %s8
  %s11 = scalar_select 0, %s10, %s8
  // Predicated region
  $region2: #{lstm_model_forward.1} parent=0 // pred_check
    _
  $region3: #{lstm_model_forward.1} parent=0 // pred_check_branch
    %13 = sbr.rel (0) target = $region5
  $region4: #{lstm_model_forward.1} parent=0 // pred_region
    _
  $region5: #{lstm_model_forward.1} parent=0 // pred_fallthru
    _
  // Predicated region
  $region6: #{lstm_model_forward.1} parent=0 // pred_check
    _
  $region7: #{lstm_model_forward.1} parent=0 // pred_check_branch
    %15 = sbr.rel (0) target = $region9
  $region8: #{lstm_model_forward.1} parent=0 // pred_region
    _
  $region9: #{lstm_model_forward.1} parent=0 // pred_fallthru
    _
  // Predicated region
  $region10: #{lstm_model_forward.1} parent=0 // pred_check
    _
  $region11: #{lstm_model_forward.1} parent=0 // pred_check_branch
    %17 = sbr.rel (0) target = $region13
  $region12: #{lstm_model_forward.1} parent=0 // pred_region
    _
  $region13: #{lstm_model_forward.1} parent=0 // pred_fallthru
    _
  // Predicated region
  $region14: #{lstm_model_forward.1} parent=0 // pred_check
    _
  $region15: #{lstm_model_forward.1} parent=0 // pred_check_branch
    %19 = sbr.rel (0) target = $region17
  $region16: #{lstm_model_forward.1} parent=0 // pred_region
    _
  $region17: #{lstm_model_forward.1} parent=0 // pred_fallthru
    _
  // Predicated region
  $region18: #{lstm_model_forward.1} parent=0 // pred_check
    _
  $region19: #{lstm_model_forward.1} parent=0 // pred_check_branch
    %21 = sbr.rel (0) target = $region21
  $region20: #{lstm_model_forward.1} parent=0 // pred_region
    _
  $region21: #{lstm_model_forward.1} parent=0 // pred_fallthru
    _
  // Predicated region
  $region22: #{lstm_model_forward.1} parent=0 // pred_check
    _
  $region23: #{lstm_model_forward.1} parent=0 // pred_check_branch
    %23 = sbr.rel (0) target = $region25
  $region24: #{lstm_model_forward.1} parent=0 // pred_region
    _
  $region25: #{lstm_model_forward.1} parent=0 // pred_fallthru
    _
  // Predicated region
  $region26: #{lstm_model_forward.1} parent=0 // pred_check
    _
  $region27: #{lstm_model_forward.1} parent=0 // pred_check_branch
    %25 = sbr.rel (0) target = $region29
  $region28: #{lstm_model_forward.1} parent=0 // pred_region
    _
  $region29: #{lstm_model_forward.1} parent=0 // pred_fallthru
    _
  %v26 = vld [vmem:[%s0] sm:$0xff]
  %v27 = vld [vmem:[%s0 + $0x8] sm:$0xff]
  %v28 = vld [vmem:[%s0 + $0x10] sm:$0xff]
  %v29 = vld [vmem:[%s0 + $0x18] sm:$0xff]
  %v30 = vld [vmem:[%s0 + $0x20] sm:$0xff]
  %v31 = vld [vmem:[%s0 + $0x28] sm:$0xff]
  %v32 = vld [vmem:[%s0 + $0x30] sm:$0xff]
  %v33 = vld [vmem:[%s0 + $0x38] sm:$0xff]
  %v34 = vld [vmem:[%s2] sm:$0xff]
  %v35 = vld [vmem:[%s2 + $0x8] sm:$0xff]
  %v36 = vld [vmem:[%s2 + $0x10] sm:$0xff]
  %v37 = vld [vmem:[%s2 + $0x18] sm:$0xff]
  %v38 = vld [vmem:[%s3] sm:$0x3]
  %v40 = vlaneseq
  %v41 = vshrl.u32 %v40, 7
  %v42 = vsub.s32 0, %v41
  %v43 = vrot.slane %v38, %v42
  %v44 = vlaneseq
  %v45 = vshrl.u32 %v44, 7
  %v46 = vsub.s32 1, %v45
  %v47 = vrot.slane %v38, %v46
  %vm50 = vcmask 130048
  %v52 = vsel %vm50, %v26, 0
  %v55 = vsel %vm50, %v27, 0
  %v58 = vsel %vm50, %v28, 0
  %v61 = vsel %vm50, %v29, 0
  %v64 = vsel %vm50, %v30, 0
  %v67 = vsel %vm50, %v31, 0
  %v70 = vsel %vm50, %v32, 0
  %v73 = vsel %vm50, %v33, 0
  %75 = vmatprep.subr.mxu0 0.0
  %76 = vmatpush1.msra.mxu0 0.0
  %77 = vmatprep.subr.mxu0 0.0
  %78 = vmatpush1.msra.mxu0 0.0
  %79 = vmatprep.subr.mxu0 0.0
  %80 = vmatpush1.msra.mxu0 0.0
  %81 = vmatprep.subr.mxu0 0.0
  %82 = vmatpush1.msra.mxu0 0.0
  %83 = vmatprep.subr.mxu0 0.0
  %84 = vmatpush1.msra.mxu0 0.0
  %85 = vmatprep.subr.mxu0 0.0
  %86 = vmatpush1.msra.mxu0 0.0
  %87 = vmatprep.subr.mxu0 0.0
  %88 = vmatpush1.msra.mxu0 0.0
  %89 = vmatprep.subr.mxu0 0.0
  %90 = vmatpush1.msra.mxu0 0.0
  %91 = vmatprep.subr.mxu0 0.0
  %92 = vmatpush1.msra.mxu0 0.0
  %93 = vmatprep.subr.mxu0 0.0
  %94 = vmatpush1.msra.mxu0 0.0
  %95 = vmatprep.subr.mxu0 0.0
  %96 = vmatpush1.msra.mxu0 0.0
  %97 = vmatprep.subr.mxu0 0.0
  %98 = vmatpush1.msra.mxu0 0.0
  %99 = vmatprep.subr.mxu0 0.0
  %100 = vmatpush1.msra.mxu0 0.0
  %101 = vmatprep.subr.mxu0 0.0
  %102 = vmatpush1.msra.mxu0 0.0
  %103 = vmatprep.subr.mxu0 %v37
  %104 = vmatpush1.msra.mxu0 %v36
  %105 = vmatprep.subr.mxu0 %v35
  %106 = vmatpush1.msra.mxu0 %v34
  %107 = vmatprep.subr.mxu0 0.0
  %108 = vmatpush2.msra.mxu0 0.0
  %109 = vmatprep.subr.mxu0 0.0
  %110 = vmatpush2.msra.mxu0 0.0
  %111 = vmatprep.subr.mxu0 0.0
  %112 = vmatpush2.msra.mxu0 0.0
  %113 = vmatprep.subr.mxu0 0.0
  %114 = vmatpush2.msra.mxu0 0.0
  %115 = vmatprep.subr.mxu0 0.0
  %116 = vmatpush2.msra.mxu0 0.0
  %117 = vmatprep.subr.mxu0 0.0
  %118 = vmatpush2.msra.mxu0 0.0
  %119 = vmatprep.subr.mxu0 0.0
  %120 = vmatpush2.msra.mxu0 0.0
  %121 = vmatprep.subr.mxu0 0.0
  %122 = vmatpush2.msra.mxu0 0.0
  %123 = vmatprep.subr.mxu0 0.0
  %124 = vmatpush2.msra.mxu0 0.0
  %125 = vmatprep.subr.mxu0 0.0
  %126 = vmatpush2.msra.mxu0 0.0
  %127 = vmatprep.subr.mxu0 0.0
  %128 = vmatpush2.msra.mxu0 0.0
  %129 = vmatprep.subr.mxu0 0.0
  %130 = vmatpush2.msra.mxu0 0.0
  %131 = vmatprep.subr.mxu0 0.0
  %132 = vmatpush2.msra.mxu0 0.0
  %133 = vmatprep.subr.mxu0 0.0
  %134 = vmatpush2.msra.mxu0 0.0
  %135 = vmatprep.subr.mxu0 0.0
  %136 = vmatpush2.msra.mxu0 0.0
  %137 = vmatprep.subr.mxu0 0.0
  %138 = vmatpush2.msra.mxu0 0.0
  %139 = vmatprep.mubr.f32.mxu0 0.0
  %140 = vmatmul.mubr.f32.gmra.mxu0 %v52
  %v141 = vpop.f32.mrf.mxu0
  %v142 = vadd.f32 %v43, %v141
  %v143 = vpop.f32.mrf.mxu0
  %v144 = vadd.f32 %v47, %v143
  %145 = vmatprep.mubr.f32.mxu0 0.0
  %146 = vmatmul.mubr.f32.gmra.mxu0 %v55
  %v147 = vpop.f32.mrf.mxu0
  %v148 = vadd.f32 %v43, %v147
  %v149 = vpop.f32.mrf.mxu0
  %v150 = vadd.f32 %v47, %v149
  %151 = vmatprep.mubr.f32.mxu0 0.0
  %152 = vmatmul.mubr.f32.gmra.mxu0 %v58
  %v153 = vpop.f32.mrf.mxu0
  %v154 = vadd.f32 %v43, %v153
  %v155 = vpop.f32.mrf.mxu0
  %v156 = vadd.f32 %v47, %v155
  %157 = vmatprep.mubr.f32.mxu0 0.0
  %158 = vmatmul.mubr.f32.gmra.mxu0 %v61
  %v159 = vpop.f32.mrf.mxu0
  %v160 = vadd.f32 %v43, %v159
  %v161 = vpop.f32.mrf.mxu0
  %v162 = vadd.f32 %v47, %v161
  %163 = vmatprep.mubr.f32.mxu0 0.0
  %164 = vmatmul.mubr.f32.gmra.mxu0 %v64
  %v165 = vpop.f32.mrf.mxu0
  %v166 = vadd.f32 %v43, %v165
  %v167 = vpop.f32.mrf.mxu0
  %v168 = vadd.f32 %v47, %v167
  %169 = vmatprep.mubr.f32.mxu0 0.0
  %170 = vmatmul.mubr.f32.gmra.mxu0 %v67
  %v171 = vpop.f32.mrf.mxu0
  %v172 = vadd.f32 %v43, %v171
  %v173 = vpop.f32.mrf.mxu0
  %v174 = vadd.f32 %v47, %v173
  %175 = vmatprep.mubr.f32.mxu0 0.0
  %176 = vmatmul.mubr.f32.gmra.mxu0 %v70
  %v177 = vpop.f32.mrf.mxu0
  %v178 = vadd.f32 %v43, %v177
  %v179 = vpop.f32.mrf.mxu0
  %v180 = vadd.f32 %v47, %v179
  %181 = vmatprep.mubr.f32.mxu0 0.0
  %182 = vmatmul.mubr.f32.gmra.mxu0 %v73
  %v183 = vpop.f32.mrf.mxu0
  %v184 = vadd.f32 %v43, %v183
  %v185 = vpop.f32.mrf.mxu0
  %v186 = vadd.f32 %v47, %v185
  %187 = vdwg.mxu0
  %188 = vst [vmem:[#allocation2] sm:$0xff] %v142
  %189 = vst [vmem:[#allocation2 + $0x8] sm:$0xff] %v144
  %190 = vst [vmem:[#allocation2 + $0x10] sm:$0xff] %v148
  %191 = vst [vmem:[#allocation2 + $0x18] sm:$0xff] %v150
  %192 = vst [vmem:[#allocation2 + $0x20] sm:$0xff] %v154
  %193 = vst [vmem:[#allocation2 + $0x28] sm:$0xff] %v156
  %194 = vst [vmem:[#allocation2 + $0x30] sm:$0xff] %v160
  %195 = vst [vmem:[#allocation2 + $0x38] sm:$0xff] %v162
  %196 = vst [vmem:[#allocation2 + $0x40] sm:$0xff] %v166
  %197 = vst [vmem:[#allocation2 + $0x48] sm:$0xff] %v168
  %198 = vst [vmem:[#allocation2 + $0x50] sm:$0xff] %v172
  %199 = vst [vmem:[#allocation2 + $0x58] sm:$0xff] %v174
  %200 = vst [vmem:[#allocation2 + $0x60] sm:$0xff] %v178
  %201 = vst [vmem:[#allocation2 + $0x68] sm:$0xff] %v180
  %202 = vst [vmem:[#allocation2 + $0x70] sm:$0xff] %v184
  %203 = vst [vmem:[#allocation2 + $0x78] sm:$0xff] %v186
  %v204 = vld [vmem:[%s4] sm:$0xff]
  %v205 = vld [vmem:[%s4 + $0x8] sm:$0xff]
  %v206 = vld [vmem:[%s4 + $0x10] sm:$0xff]
  %v207 = vld [vmem:[%s4 + $0x18] sm:$0xff]
  %v208 = vld [vmem:[%s4 + $0x20] sm:$0xff]
  %v209 = vld [vmem:[%s4 + $0x28] sm:$0xff]
  %v210 = vld [vmem:[%s4 + $0x30] sm:$0xff]
  %v211 = vld [vmem:[%s4 + $0x38] sm:$0xff]
  %v212 = vld [vmem:[%s4 + $0x40] sm:$0xff]
  %v213 = vld [vmem:[%s4 + $0x48] sm:$0xff]
  %v214 = vld [vmem:[%s4 + $0x50] sm:$0xff]
  %v215 = vld [vmem:[%s4 + $0x58] sm:$0xff]
  %v216 = vld [vmem:[%s4 + $0x60] sm:$0xff]
  %v217 = vld [vmem:[%s4 + $0x68] sm:$0xff]
  %v218 = vld [vmem:[%s4 + $0x70] sm:$0xff]
  %v219 = vld [vmem:[%s4 + $0x78] sm:$0xff]
  %v220 = vld [vmem:[%s1] sm:$0x1]
  %v221 = vld [vmem:[#allocation2] sm:$0xff]
  %v222 = vld [vmem:[#allocation2 + $0x8] sm:$0xff]
  %vm223 = vcmask 523264
  %v225 = vsel %vm223, 0.0, 0
  %227 = vmatprep.subr.mxu0 0.0
  %228 = vmatpush1.msra.mxu0 0.0
  %229 = vmatprep.subr.mxu0 0.0
  %230 = vmatpush1.msra.mxu0 0.0
  %231 = vmatprep.subr.mxu0 0.0
  %232 = vmatpush1.msra.mxu0 0.0
  %233 = vmatprep.subr.mxu0 0.0
  %234 = vmatpush1.msra.mxu0 0.0
  %235 = vmatprep.subr.mxu0 0.0
  %236 = vmatpush1.msra.mxu0 0.0
  %237 = vmatprep.subr.mxu0 0.0
  %238 = vmatpush1.msra.mxu0 0.0
  %239 = vmatprep.subr.mxu0 0.0
  %240 = vmatpush1.msra.mxu0 0.0
  %241 = vmatprep.subr.mxu0 0.0
  %242 = vmatpush1.msra.mxu0 0.0
  %243 = vmatprep.subr.mxu0 %v219
  %244 = vmatpush1.msra.mxu0 %v218
  %245 = vmatprep.subr.mxu0 %v217
  %246 = vmatpush1.msra.mxu0 %v216
  %247 = vmatprep.subr.mxu0 %v215
  %248 = vmatpush1.msra.mxu0 %v214
  %249 = vmatprep.subr.mxu0 %v213
  %250 = vmatpush1.msra.mxu0 %v212
  %251 = vmatprep.subr.mxu0 %v211
  %252 = vmatpush1.msra.mxu0 %v210
  %253 = vmatprep.subr.mxu0 %v209
  %254 = vmatpush1.msra.mxu0 %v208
  %255 = vmatprep.subr.mxu0 %v207
  %256 = vmatpush1.msra.mxu0 %v206
  %257 = vmatprep.subr.mxu0 %v205
  %258 = vmatpush1.msra.mxu0 %v204
  %259 = vmatprep.subr.mxu0 0.0
  %260 = vmatpush2.msra.mxu0 0.0
  %261 = vmatprep.subr.mxu0 0.0
  %262 = vmatpush2.msra.mxu0 0.0
  %263 = vmatprep.subr.mxu0 0.0
  %264 = vmatpush2.msra.mxu0 0.0
  %265 = vmatprep.subr.mxu0 0.0
  %266 = vmatpush2.msra.mxu0 0.0
  %267 = vmatprep.subr.mxu0 0.0
  %268 = vmatpush2.msra.mxu0 0.0
  %269 = vmatprep.subr.mxu0 0.0
  %270 = vmatpush2.msra.mxu0 0.0
  %271 = vmatprep.subr.mxu0 0.0
  %272 = vmatpush2.msra.mxu0 0.0
  %273 = vmatprep.subr.mxu0 0.0
  %274 = vmatpush2.msra.mxu0 0.0
  %275 = vmatprep.subr.mxu0 0.0
  %276 = vmatpush2.msra.mxu0 0.0
  %277 = vmatprep.subr.mxu0 0.0
  %278 = vmatpush2.msra.mxu0 0.0
  %279 = vmatprep.subr.mxu0 0.0
  %280 = vmatpush2.msra.mxu0 0.0
  %281 = vmatprep.subr.mxu0 0.0
  %282 = vmatpush2.msra.mxu0 0.0
  %283 = vmatprep.subr.mxu0 0.0
  %284 = vmatpush2.msra.mxu0 0.0
  %285 = vmatprep.subr.mxu0 0.0
  %286 = vmatpush2.msra.mxu0 0.0
  %287 = vmatprep.subr.mxu0 0.0
  %288 = vmatpush2.msra.mxu0 0.0
  %289 = vmatprep.subr.mxu0 0.0
  %290 = vmatpush2.msra.mxu0 0.0
  %291 = vmatprep.mubr.f32.mxu0 0.0
  %292 = vmatmul.mubr.f32.gmra.mxu0 %v225
  %v293 = vpop.f32.mrf.mxu0
  %v294 = vadd.f32 0.0, %v293
  %v295 = vpop.f32.mrf.mxu0
  %v296 = vadd.f32 0.0, %v295
  %297 = vdwg.mxu0
  %v298 = vadd.f32 %v221, %v294
  %v299 = vadd.f32 %v222, %v296
  %v300 = vtanh.pop %v298
  %v301 = vtanh.pop %v299
  %v302 = vmul.f32 %v300, 0.5
  %v303 = vmul.f32 %v301, 0.5
  %v304 = vadd.f32 %v302, 0.5
  %v305 = vadd.f32 %v303, 0.5
  %v306 = vmul.f32 %v304, 0.0
  %v307 = vmul.f32 %v304, %v301
  %309 = vrot.lane.b32.xlu0 %v307, 64
  %v310 = vpop.permute.xlu0 %309
  %v312 = vadd.f32 %v306, %v310
  %v313 = vtanh.pop %v312
  %v314 = vmul.f32 %v305, %v313
  %v315 = vsub.s32 0, %v220
  %vm316 = vcmp.ge.s32.totalorder %v315, 0
  %vm317 = vcmp.lt.s32.totalorder %v315, 8
  %vm318 = vmand %vm316, %vm317
  %v319 = vsel %vm318, 1, 0
  %v320 = vlaneseq
  %v321 = vshrl.u32 %v320, 7
  %v322 = vsub.s32 0, %v321
  %v323 = vrot.slane %v319, %v322
  %vm324 = vcmp.eq.s32.totalorder %v323, 1
  %326 = vrot.lane.b32.xlu0 %v314, 64
  %v327 = vpop.permute.xlu0 %326
  %v329 = vsel %vm324, %v327, 0.0
  %331 = vrot.lane.b32.xlu0 %v312, 64
  %v332 = vpop.permute.xlu0 %331
  %v334 = vsel %vm324, %v332, 0.0
  %s335 = scalar_lea.vmem [#allocation2], 16
  %v336 = vld [vmem:[%s335] sm:$0xff]
  %v337 = vld [vmem:[%s335 + $0x8] sm:$0xff]
  %v339 = vsel %vm223, %v329, 0
  %341 = vmatprep.subr.mxu0 0.0
  %342 = vmatpush1.msra.mxu0 0.0
  %343 = vmatprep.subr.mxu0 0.0
  %344 = vmatpush1.msra.mxu0 0.0
  %345 = vmatprep.subr.mxu0 0.0
  %346 = vmatpush1.msra.mxu0 0.0
  %347 = vmatprep.subr.mxu0 0.0
  %348 = vmatpush1.msra.mxu0 0.0
  %349 = vmatprep.subr.mxu0 0.0
  %350 = vmatpush1.msra.mxu0 0.0
  %351 = vmatprep.subr.mxu0 0.0
  %352 = vmatpush1.msra.mxu0 0.0
  %353 = vmatprep.subr.mxu0 0.0
  %354 = vmatpush1.msra.mxu0 0.0
  %355 = vmatprep.subr.mxu0 0.0
  %356 = vmatpush1.msra.mxu0 0.0
  %357 = vmatprep.subr.mxu0 %v219
  %358 = vmatpush1.msra.mxu0 %v218
  %359 = vmatprep.subr.mxu0 %v217
  %360 = vmatpush1.msra.mxu0 %v216
  %361 = vmatprep.subr.mxu0 %v215
  %362 = vmatpush1.msra.mxu0 %v214
  %363 = vmatprep.subr.mxu0 %v213
  %364 = vmatpush1.msra.mxu0 %v212
  %365 = vmatprep.subr.mxu0 %v211
  %366 = vmatpush1.msra.mxu0 %v210
  %367 = vmatprep.subr.mxu0 %v209
  %368 = vmatpush1.msra.mxu0 %v208
  %369 = vmatprep.subr.mxu0 %v207
  %370 = vmatpush1.msra.mxu0 %v206
  %371 = vmatprep.subr.mxu0 %v205
  %372 = vmatpush1.msra.mxu0 %v204
  %373 = vmatprep.subr.mxu0 0.0
  %374 = vmatpush2.msra.mxu0 0.0
  %375 = vmatprep.subr.mxu0 0.0
  %376 = vmatpush2.msra.mxu0 0.0
  %377 = vmatprep.subr.mxu0 0.0
  %378 = vmatpush2.msra.mxu0 0.0
  %379 = vmatprep.subr.mxu0 0.0
  %380 = vmatpush2.msra.mxu0 0.0
  %381 = vmatprep.subr.mxu0 0.0
  %382 = vmatpush2.msra.mxu0 0.0
  %383 = vmatprep.subr.mxu0 0.0
  %384 = vmatpush2.msra.mxu0 0.0
  %385 = vmatprep.subr.mxu0 0.0
  %386 = vmatpush2.msra.mxu0 0.0
  %387 = vmatprep.subr.mxu0 0.0
  %388 = vmatpush2.msra.mxu0 0.0
  %389 = vmatprep.subr.mxu0 0.0
  %390 = vmatpush2.msra.mxu0 0.0
  %391 = vmatprep.subr.mxu0 0.0
  %392 = vmatpush2.msra.mxu0 0.0
  %393 = vmatprep.subr.mxu0 0.0
  %394 = vmatpush2.msra.mxu0 0.0
  %395 = vmatprep.subr.mxu0 0.0
  %396 = vmatpush2.msra.mxu0 0.0
  %397 = vmatprep.subr.mxu0 0.0
  %398 = vmatpush2.msra.mxu0 0.0
  %399 = vmatprep.subr.mxu0 0.0
  %400 = vmatpush2.msra.mxu0 0.0
  %401 = vmatprep.subr.mxu0 0.0
  %402 = vmatpush2.msra.mxu0 0.0
  %403 = vmatprep.subr.mxu0 0.0
  %404 = vmatpush2.msra.mxu0 0.0
  %405 = vmatprep.mubr.f32.mxu0 0.0
  %406 = vmatmul.mubr.f32.gmra.mxu0 %v339
  %v407 = vpop.f32.mrf.mxu0
  %v408 = vadd.f32 0.0, %v407
  %v409 = vpop.f32.mrf.mxu0
  %v410 = vadd.f32 0.0, %v409
  %411 = vdwg.mxu0
  %v412 = vadd.f32 %v336, %v408
  %v413 = vadd.f32 %v337, %v410
  %v414 = vtanh.pop %v412
  %v415 = vtanh.pop %v413
  %v416 = vmul.f32 %v414, 0.5
  %v417 = vmul.f32 %v415, 0.5
  %v418 = vadd.f32 %v416, 0.5
  %v419 = vadd.f32 %v417, 0.5
  %421 = vrot.lane.b32.xlu0 %v334, 64
  %v422 = vpop.permute.xlu0 %421
  %v424 = vmul.f32 %v418, %v422
  %v425 = vmul.f32 %v418, %v415
  %427 = vrot.lane.b32.xlu0 %v425, 64
  %v428 = vpop.permute.xlu0 %427
  %v430 = vadd.f32 %v424, %v428
  %v431 = vtanh.pop %v430
  %v432 = vmul.f32 %v419, %v431
  %v433 = vsub.s32 1, %v220
  %vm434 = vcmp.ge.s32.totalorder %v433, 0
  %vm435 = vcmp.lt.s32.totalorder %v433, 8
  %vm436 = vmand %vm434, %vm435
  %v437 = vsel %vm436, 1, 0
  %v438 = vlaneseq
  %v439 = vshrl.u32 %v438, 7
  %v440 = vsub.s32 0, %v439
  %v441 = vrot.slane %v437, %v440
  %vm442 = vcmp.eq.s32.totalorder %v441, 1
  %444 = vrot.lane.b32.xlu0 %v432, 64
  %v445 = vpop.permute.xlu0 %444
  %v447 = vsel %vm442, %v445, %v329
  %449 = vrot.lane.b32.xlu0 %v430, 64
  %v450 = vpop.permute.xlu0 %449
  %v452 = vsel %vm442, %v450, %v334
  %s453 = scalar_lea.vmem [#allocation2], 32
  %v454 = vld [vmem:[%s453] sm:$0xff]
  %v455 = vld [vmem:[%s453 + $0x8] sm:$0xff]
  %v457 = vsel %vm223, %v447, 0
  %459 = vmatprep.subr.mxu0 0.0
  %460 = vmatpush1.msra.mxu0 0.0
  %461 = vmatprep.subr.mxu0 0.0
  %462 = vmatpush1.msra.mxu0 0.0
  %463 = vmatprep.subr.mxu0 0.0
  %464 = vmatpush1.msra.mxu0 0.0
  %465 = vmatprep.subr.mxu0 0.0
  %466 = vmatpush1.msra.mxu0 0.0
  %467 = vmatprep.subr.mxu0 0.0
  %468 = vmatpush1.msra.mxu0 0.0
  %469 = vmatprep.subr.mxu0 0.0
  %470 = vmatpush1.msra.mxu0 0.0
  %471 = vmatprep.subr.mxu0 0.0
  %472 = vmatpush1.msra.mxu0 0.0
  %473 = vmatprep.subr.mxu0 0.0
  %474 = vmatpush1.msra.mxu0 0.0
  %475 = vmatprep.subr.mxu0 %v219
  %476 = vmatpush1.msra.mxu0 %v218
  %477 = vmatprep.subr.mxu0 %v217
  %478 = vmatpush1.msra.mxu0 %v216
  %479 = vmatprep.subr.mxu0 %v215
  %480 = vmatpush1.msra.mxu0 %v214
  %481 = vmatprep.subr.mxu0 %v213
  %482 = vmatpush1.msra.mxu0 %v212
  %483 = vmatprep.subr.mxu0 %v211
  %484 = vmatpush1.msra.mxu0 %v210
  %485 = vmatprep.subr.mxu0 %v209
  %486 = vmatpush1.msra.mxu0 %v208
  %487 = vmatprep.subr.mxu0 %v207
  %488 = vmatpush1.msra.mxu0 %v206
  %489 = vmatprep.subr.mxu0 %v205
  %490 = vmatpush1.msra.mxu0 %v204
  %491 = vmatprep.subr.mxu0 0.0
  %492 = vmatpush2.msra.mxu0 0.0
  %493 = vmatprep.subr.mxu0 0.0
  %494 = vmatpush2.msra.mxu0 0.0
  %495 = vmatprep.subr.mxu0 0.0
  %496 = vmatpush2.msra.mxu0 0.0
  %497 = vmatprep.subr.mxu0 0.0
  %498 = vmatpush2.msra.mxu0 0.0
  %499 = vmatprep.subr.mxu0 0.0
  %500 = vmatpush2.msra.mxu0 0.0
  %501 = vmatprep.subr.mxu0 0.0
  %502 = vmatpush2.msra.mxu0 0.0
  %503 = vmatprep.subr.mxu0 0.0
  %504 = vmatpush2.msra.mxu0 0.0
  %505 = vmatprep.subr.mxu0 0.0
  %506 = vmatpush2.msra.mxu0 0.0
  %507 = vmatprep.subr.mxu0 0.0
  %508 = vmatpush2.msra.mxu0 0.0
  %509 = vmatprep.subr.mxu0 0.0
  %510 = vmatpush2.msra.mxu0 0.0
  %511 = vmatprep.subr.mxu0 0.0
  %512 = vmatpush2.msra.mxu0 0.0
  %513 = vmatprep.subr.mxu0 0.0
  %514 = vmatpush2.msra.mxu0 0.0
  %515 = vmatprep.subr.mxu0 0.0
  %516 = vmatpush2.msra.mxu0 0.0
  %517 = vmatprep.subr.mxu0 0.0
  %518 = vmatpush2.msra.mxu0 0.0
  %519 = vmatprep.subr.mxu0 0.0
  %520 = vmatpush2.msra.mxu0 0.0
  %521 = vmatprep.subr.mxu0 0.0
  %522 = vmatpush2.msra.mxu0 0.0
  %523 = vmatprep.mubr.f32.mxu0 0.0
  %524 = vmatmul.mubr.f32.gmra.mxu0 %v457
  %v525 = vpop.f32.mrf.mxu0
  %v526 = vadd.f32 0.0, %v525
  %v527 = vpop.f32.mrf.mxu0
  %v528 = vadd.f32 0.0, %v527
  %529 = vdwg.mxu0
  %v530 = vadd.f32 %v454, %v526
  %v531 = vadd.f32 %v455, %v528
  %v532 = vtanh.pop %v530
  %v533 = vtanh.pop %v531
  %v534 = vmul.f32 %v532, 0.5
  %v535 = vmul.f32 %v533, 0.5
  %v536 = vadd.f32 %v534, 0.5
  %v537 = vadd.f32 %v535, 0.5
  %539 = vrot.lane.b32.xlu0 %v452, 64
  %v540 = vpop.permute.xlu0 %539
  %v542 = vmul.f32 %v536, %v540
  %v543 = vmul.f32 %v536, %v533
  %545 = vrot.lane.b32.xlu0 %v543, 64
  %v546 = vpop.permute.xlu0 %545
  %v548 = vadd.f32 %v542, %v546
  %v549 = vtanh.pop %v548
  %v550 = vmul.f32 %v537, %v549
  %v551 = vsub.s32 2, %v220
  %vm552 = vcmp.ge.s32.totalorder %v551, 0
  %vm553 = vcmp.lt.s32.totalorder %v551, 8
  %vm554 = vmand %vm552, %vm553
  %v555 = vsel %vm554, 1, 0
  %v556 = vlaneseq
  %v557 = vshrl.u32 %v556, 7
  %v558 = vsub.s32 0, %v557
  %v559 = vrot.slane %v555, %v558
  %vm560 = vcmp.eq.s32.totalorder %v559, 1
  %562 = vrot.lane.b32.xlu0 %v550, 64
  %v563 = vpop.permute.xlu0 %562
  %v565 = vsel %vm560, %v563, %v447
  %567 = vrot.lane.b32.xlu0 %v548, 64
  %v568 = vpop.permute.xlu0 %567
  %v570 = vsel %vm560, %v568, %v452
  %s571 = scalar_lea.vmem [#allocation2], 48
  %v572 = vld [vmem:[%s571] sm:$0xff]
  %v573 = vld [vmem:[%s571 + $0x8] sm:$0xff]
  %v575 = vsel %vm223, %v565, 0
  %577 = vmatprep.subr.mxu0 0.0
  %578 = vmatpush1.msra.mxu0 0.0
  %579 = vmatprep.subr.mxu0 0.0
  %580 = vmatpush1.msra.mxu0 0.0
  %581 = vmatprep.subr.mxu0 0.0
  %582 = vmatpush1.msra.mxu0 0.0
  %583 = vmatprep.subr.mxu0 0.0
  %584 = vmatpush1.msra.mxu0 0.0
  %585 = vmatprep.subr.mxu0 0.0
  %586 = vmatpush1.msra.mxu0 0.0
  %587 = vmatprep.subr.mxu0 0.0
  %588 = vmatpush1.msra.mxu0 0.0
  %589 = vmatprep.subr.mxu0 0.0
  %590 = vmatpush1.msra.mxu0 0.0
  %591 = vmatprep.subr.mxu0 0.0
  %592 = vmatpush1.msra.mxu0 0.0
  %593 = vmatprep.subr.mxu0 %v219
  %594 = vmatpush1.msra.mxu0 %v218
  %595 = vmatprep.subr.mxu0 %v217
  %596 = vmatpush1.msra.mxu0 %v216
  %597 = vmatprep.subr.mxu0 %v215
  %598 = vmatpush1.msra.mxu0 %v214
  %599 = vmatprep.subr.mxu0 %v213
  %600 = vmatpush1.msra.mxu0 %v212
  %601 = vmatprep.subr.mxu0 %v211
  %602 = vmatpush1.msra.mxu0 %v210
  %603 = vmatprep.subr.mxu0 %v209
  %604 = vmatpush1.msra.mxu0 %v208
  %605 = vmatprep.subr.mxu0 %v207
  %606 = vmatpush1.msra.mxu0 %v206
  %607 = vmatprep.subr.mxu0 %v205
  %608 = vmatpush1.msra.mxu0 %v204
  %609 = vmatprep.subr.mxu0 0.0
  %610 = vmatpush2.msra.mxu0 0.0
  %611 = vmatprep.subr.mxu0 0.0
  %612 = vmatpush2.msra.mxu0 0.0
  %613 = vmatprep.subr.mxu0 0.0
  %614 = vmatpush2.msra.mxu0 0.0
  %615 = vmatprep.subr.mxu0 0.0
  %616 = vmatpush2.msra.mxu0 0.0
  %617 = vmatprep.subr.mxu0 0.0
  %618 = vmatpush2.msra.mxu0 0.0
  %619 = vmatprep.subr.mxu0 0.0
  %620 = vmatpush2.msra.mxu0 0.0
  %621 = vmatprep.subr.mxu0 0.0
  %622 = vmatpush2.msra.mxu0 0.0
  %623 = vmatprep.subr.mxu0 0.0
  %624 = vmatpush2.msra.mxu0 0.0
  %625 = vmatprep.subr.mxu0 0.0
  %626 = vmatpush2.msra.mxu0 0.0
  %627 = vmatprep.subr.mxu0 0.0
  %628 = vmatpush2.msra.mxu0 0.0
  %629 = vmatprep.subr.mxu0 0.0
  %630 = vmatpush2.msra.mxu0 0.0
  %631 = vmatprep.subr.mxu0 0.0
  %632 = vmatpush2.msra.mxu0 0.0
  %633 = vmatprep.subr.mxu0 0.0
  %634 = vmatpush2.msra.mxu0 0.0
  %635 = vmatprep.subr.mxu0 0.0
  %636 = vmatpush2.msra.mxu0 0.0
  %637 = vmatprep.subr.mxu0 0.0
  %638 = vmatpush2.msra.mxu0 0.0
  %639 = vmatprep.subr.mxu0 0.0
  %640 = vmatpush2.msra.mxu0 0.0
  %641 = vmatprep.mubr.f32.mxu0 0.0
  %642 = vmatmul.mubr.f32.gmra.mxu0 %v575
  %v643 = vpop.f32.mrf.mxu0
  %v644 = vadd.f32 0.0, %v643
  %v645 = vpop.f32.mrf.mxu0
  %v646 = vadd.f32 0.0, %v645
  %647 = vdwg.mxu0
  %v648 = vadd.f32 %v572, %v644
  %v649 = vadd.f32 %v573, %v646
  %v650 = vtanh.pop %v648
  %v651 = vtanh.pop %v649
  %v652 = vmul.f32 %v650, 0.5
  %v653 = vmul.f32 %v651, 0.5
  %v654 = vadd.f32 %v652, 0.5
  %v655 = vadd.f32 %v653, 0.5
  %657 = vrot.lane.b32.xlu0 %v570, 64
  %v658 = vpop.permute.xlu0 %657
  %v660 = vmul.f32 %v654, %v658
  %v661 = vmul.f32 %v654, %v651
  %663 = vrot.lane.b32.xlu0 %v661, 64
  %v664 = vpop.permute.xlu0 %663
  %v666 = vadd.f32 %v660, %v664
  %v667 = vtanh.pop %v666
  %v668 = vmul.f32 %v655, %v667
  %v669 = vsub.s32 3, %v220
  %vm670 = vcmp.ge.s32.totalorder %v669, 0
  %vm671 = vcmp.lt.s32.totalorder %v669, 8
  %vm672 = vmand %vm670, %vm671
  %v673 = vsel %vm672, 1, 0
  %v674 = vlaneseq
  %v675 = vshrl.u32 %v674, 7
  %v676 = vsub.s32 0, %v675
  %v677 = vrot.slane %v673, %v676
  %vm678 = vcmp.eq.s32.totalorder %v677, 1
  %680 = vrot.lane.b32.xlu0 %v668, 64
  %v681 = vpop.permute.xlu0 %680
  %v683 = vsel %vm678, %v681, %v565
  %685 = vrot.lane.b32.xlu0 %v666, 64
  %v686 = vpop.permute.xlu0 %685
  %v688 = vsel %vm678, %v686, %v570
  %s689 = scalar_lea.vmem [#allocation2], 64
  %v690 = vld [vmem:[%s689] sm:$0xff]
  %v691 = vld [vmem:[%s689 + $0x8] sm:$0xff]
  %v693 = vsel %vm223, %v683, 0
  %695 = vmatprep.subr.mxu0 0.0
  %696 = vmatpush1.msra.mxu0 0.0
  %697 = vmatprep.subr.mxu0 0.0
  %698 = vmatpush1.msra.mxu0 0.0
  %699 = vmatprep.subr.mxu0 0.0
  %700 = vmatpush1.msra.mxu0 0.0
  %701 = vmatprep.subr.mxu0 0.0
  %702 = vmatpush1.msra.mxu0 0.0
  %703 = vmatprep.subr.mxu0 0.0
  %704 = vmatpush1.msra.mxu0 0.0
  %705 = vmatprep.subr.mxu0 0.0
  %706 = vmatpush1.msra.mxu0 0.0
  %707 = vmatprep.subr.mxu0 0.0
  %708 = vmatpush1.msra.mxu0 0.0
  %709 = vmatprep.subr.mxu0 0.0
  %710 = vmatpush1.msra.mxu0 0.0
  %711 = vmatprep.subr.mxu0 %v219
  %712 = vmatpush1.msra.mxu0 %v218
  %713 = vmatprep.subr.mxu0 %v217
  %714 = vmatpush1.msra.mxu0 %v216
  %715 = vmatprep.subr.mxu0 %v215
  %716 = vmatpush1.msra.mxu0 %v214
  %717 = vmatprep.subr.mxu0 %v213
  %718 = vmatpush1.msra.mxu0 %v212
  %719 = vmatprep.subr.mxu0 %v211
  %720 = vmatpush1.msra.mxu0 %v210
  %721 = vmatprep.subr.mxu0 %v209
  %722 = vmatpush1.msra.mxu0 %v208
  %723 = vmatprep.subr.mxu0 %v207
  %724 = vmatpush1.msra.mxu0 %v206
  %725 = vmatprep.subr.mxu0 %v205
  %726 = vmatpush1.msra.mxu0 %v204
  %727 = vmatprep.subr.mxu0 0.0
  %728 = vmatpush2.msra.mxu0 0.0
  %729 = vmatprep.subr.mxu0 0.0
  %730 = vmatpush2.msra.mxu0 0.0
  %731 = vmatprep.subr.mxu0 0.0
  %732 = vmatpush2.msra.mxu0 0.0
  %733 = vmatprep.subr.mxu0 0.0
  %734 = vmatpush2.msra.mxu0 0.0
  %735 = vmatprep.subr.mxu0 0.0
  %736 = vmatpush2.msra.mxu0 0.0
  %737 = vmatprep.subr.mxu0 0.0
  %738 = vmatpush2.msra.mxu0 0.0
  %739 = vmatprep.subr.mxu0 0.0
  %740 = vmatpush2.msra.mxu0 0.0
  %741 = vmatprep.subr.mxu0 0.0
  %742 = vmatpush2.msra.mxu0 0.0
  %743 = vmatprep.subr.mxu0 0.0
  %744 = vmatpush2.msra.mxu0 0.0
  %745 = vmatprep.subr.mxu0 0.0
  %746 = vmatpush2.msra.mxu0 0.0
  %747 = vmatprep.subr.mxu0 0.0
  %748 = vmatpush2.msra.mxu0 0.0
  %749 = vmatprep.subr.mxu0 0.0
  %750 = vmatpush2.msra.mxu0 0.0
  %751 = vmatprep.subr.mxu0 0.0
  %752 = vmatpush2.msra.mxu0 0.0
  %753 = vmatprep.subr.mxu0 0.0
  %754 = vmatpush2.msra.mxu0 0.0
  %755 = vmatprep.subr.mxu0 0.0
  %756 = vmatpush2.msra.mxu0 0.0
  %757 = vmatprep.subr.mxu0 0.0
  %758 = vmatpush2.msra.mxu0 0.0
  %759 = vmatprep.mubr.f32.mxu0 0.0
  %760 = vmatmul.mubr.f32.gmra.mxu0 %v693
  %v761 = vpop.f32.mrf.mxu0
  %v762 = vadd.f32 0.0, %v761
  %v763 = vpop.f32.mrf.mxu0
  %v764 = vadd.f32 0.0, %v763
  %765 = vdwg.mxu0
  %v766 = vadd.f32 %v690, %v762
  %v767 = vadd.f32 %v691, %v764
  %v768 = vtanh.pop %v766
  %v769 = vtanh.pop %v767
  %v770 = vmul.f32 %v768, 0.5
  %v771 = vmul.f32 %v769, 0.5
  %v772 = vadd.f32 %v770, 0.5
  %v773 = vadd.f32 %v771, 0.5
  %775 = vrot.lane.b32.xlu0 %v688, 64
  %v776 = vpop.permute.xlu0 %775
  %v778 = vmul.f32 %v772, %v776
  %v779 = vmul.f32 %v772, %v769
  %781 = vrot.lane.b32.xlu0 %v779, 64
  %v782 = vpop.permute.xlu0 %781
  %v784 = vadd.f32 %v778, %v782
  %v785 = vtanh.pop %v784
  %v786 = vmul.f32 %v773, %v785
  %v787 = vsub.s32 4, %v220
  %vm788 = vcmp.ge.s32.totalorder %v787, 0
  %vm789 = vcmp.lt.s32.totalorder %v787, 8
  %vm790 = vmand %vm788, %vm789
  %v791 = vsel %vm790, 1, 0
  %v792 = vlaneseq
  %v793 = vshrl.u32 %v792, 7
  %v794 = vsub.s32 0, %v793
  %v795 = vrot.slane %v791, %v794
  %vm796 = vcmp.eq.s32.totalorder %v795, 1
  %798 = vrot.lane.b32.xlu0 %v786, 64
  %v799 = vpop.permute.xlu0 %798
  %v801 = vsel %vm796, %v799, %v683
  %803 = vrot.lane.b32.xlu0 %v784, 64
  %v804 = vpop.permute.xlu0 %803
  %v806 = vsel %vm796, %v804, %v688
  %s807 = scalar_lea.vmem [#allocation2], 80
  %v808 = vld [vmem:[%s807] sm:$0xff]
  %v809 = vld [vmem:[%s807 + $0x8] sm:$0xff]
  %v811 = vsel %vm223, %v801, 0
  %813 = vmatprep.subr.mxu0 0.0
  %814 = vmatpush1.msra.mxu0 0.0
  %815 = vmatprep.subr.mxu0 0.0
  %816 = vmatpush1.msra.mxu0 0.0
  %817 = vmatprep.subr.mxu0 0.0
  %818 = vmatpush1.msra.mxu0 0.0
  %819 = vmatprep.subr.mxu0 0.0
  %820 = vmatpush1.msra.mxu0 0.0
  %821 = vmatprep.subr.mxu0 0.0
  %822 = vmatpush1.msra.mxu0 0.0
  %823 = vmatprep.subr.mxu0 0.0
  %824 = vmatpush1.msra.mxu0 0.0
  %825 = vmatprep.subr.mxu0 0.0
  %826 = vmatpush1.msra.mxu0 0.0
  %827 = vmatprep.subr.mxu0 0.0
  %828 = vmatpush1.msra.mxu0 0.0
  %829 = vmatprep.subr.mxu0 %v219
  %830 = vmatpush1.msra.mxu0 %v218
  %831 = vmatprep.subr.mxu0 %v217
  %832 = vmatpush1.msra.mxu0 %v216
  %833 = vmatprep.subr.mxu0 %v215
  %834 = vmatpush1.msra.mxu0 %v214
  %835 = vmatprep.subr.mxu0 %v213
  %836 = vmatpush1.msra.mxu0 %v212
  %837 = vmatprep.subr.mxu0 %v211
  %838 = vmatpush1.msra.mxu0 %v210
  %839 = vmatprep.subr.mxu0 %v209
  %840 = vmatpush1.msra.mxu0 %v208
  %841 = vmatprep.subr.mxu0 %v207
  %842 = vmatpush1.msra.mxu0 %v206
  %843 = vmatprep.subr.mxu0 %v205
  %844 = vmatpush1.msra.mxu0 %v204
  %845 = vmatprep.subr.mxu0 0.0
  %846 = vmatpush2.msra.mxu0 0.0
  %847 = vmatprep.subr.mxu0 0.0
  %848 = vmatpush2.msra.mxu0 0.0
  %849 = vmatprep.subr.mxu0 0.0
  %850 = vmatpush2.msra.mxu0 0.0
  %851 = vmatprep.subr.mxu0 0.0
  %852 = vmatpush2.msra.mxu0 0.0
  %853 = vmatprep.subr.mxu0 0.0
  %854 = vmatpush2.msra.mxu0 0.0
  %855 = vmatprep.subr.mxu0 0.0
  %856 = vmatpush2.msra.mxu0 0.0
  %857 = vmatprep.subr.mxu0 0.0
  %858 = vmatpush2.msra.mxu0 0.0
  %859 = vmatprep.subr.mxu0 0.0
  %860 = vmatpush2.msra.mxu0 0.0
  %861 = vmatprep.subr.mxu0 0.0
  %862 = vmatpush2.msra.mxu0 0.0
  %863 = vmatprep.subr.mxu0 0.0
  %864 = vmatpush2.msra.mxu0 0.0
  %865 = vmatprep.subr.mxu0 0.0
  %866 = vmatpush2.msra.mxu0 0.0
  %867 = vmatprep.subr.mxu0 0.0
  %868 = vmatpush2.msra.mxu0 0.0
  %869 = vmatprep.subr.mxu0 0.0
  %870 = vmatpush2.msra.mxu0 0.0
  %871 = vmatprep.subr.mxu0 0.0
  %872 = vmatpush2.msra.mxu0 0.0
  %873 = vmatprep.subr.mxu0 0.0
  %874 = vmatpush2.msra.mxu0 0.0
  %875 = vmatprep.subr.mxu0 0.0
  %876 = vmatpush2.msra.mxu0 0.0
  %877 = vmatprep.mubr.f32.mxu0 0.0
  %878 = vmatmul.mubr.f32.gmra.mxu0 %v811
  %v879 = vpop.f32.mrf.mxu0
  %v880 = vadd.f32 0.0, %v879
  %v881 = vpop.f32.mrf.mxu0
  %v882 = vadd.f32 0.0, %v881
  %883 = vdwg.mxu0
  %v884 = vadd.f32 %v808, %v880
  %v885 = vadd.f32 %v809, %v882
  %v886 = vtanh.pop %v884
  %v887 = vtanh.pop %v885
  %v888 = vmul.f32 %v886, 0.5
  %v889 = vmul.f32 %v887, 0.5
  %v890 = vadd.f32 %v888, 0.5
  %v891 = vadd.f32 %v889, 0.5
  %893 = vrot.lane.b32.xlu0 %v806, 64
  %v894 = vpop.permute.xlu0 %893
  %v896 = vmul.f32 %v890, %v894
  %v897 = vmul.f32 %v890, %v887
  %899 = vrot.lane.b32.xlu0 %v897, 64
  %v900 = vpop.permute.xlu0 %899
  %v902 = vadd.f32 %v896, %v900
  %v903 = vtanh.pop %v902
  %v904 = vmul.f32 %v891, %v903
  %v905 = vsub.s32 5, %v220
  %vm906 = vcmp.ge.s32.totalorder %v905, 0
  %vm907 = vcmp.lt.s32.totalorder %v905, 8
  %vm908 = vmand %vm906, %vm907
  %v909 = vsel %vm908, 1, 0
  %v910 = vlaneseq
  %v911 = vshrl.u32 %v910, 7
  %v912 = vsub.s32 0, %v911
  %v913 = vrot.slane %v909, %v912
  %vm914 = vcmp.eq.s32.totalorder %v913, 1
  %916 = vrot.lane.b32.xlu0 %v904, 64
  %v917 = vpop.permute.xlu0 %916
  %v919 = vsel %vm914, %v917, %v801
  %921 = vrot.lane.b32.xlu0 %v902, 64
  %v922 = vpop.permute.xlu0 %921
  %v924 = vsel %vm914, %v922, %v806
  %s925 = scalar_lea.vmem [#allocation2], 96
  %v926 = vld [vmem:[%s925] sm:$0xff]
  %v927 = vld [vmem:[%s925 + $0x8] sm:$0xff]
  %v929 = vsel %vm223, %v919, 0
  %931 = vmatprep.subr.mxu0 0.0
  %932 = vmatpush1.msra.mxu0 0.0
  %933 = vmatprep.subr.mxu0 0.0
  %934 = vmatpush1.msra.mxu0 0.0
  %935 = vmatprep.subr.mxu0 0.0
  %936 = vmatpush1.msra.mxu0 0.0
  %937 = vmatprep.subr.mxu0 0.0
  %938 = vmatpush1.msra.mxu0 0.0
  %939 = vmatprep.subr.mxu0 0.0
  %940 = vmatpush1.msra.mxu0 0.0
  %941 = vmatprep.subr.mxu0 0.0
  %942 = vmatpush1.msra.mxu0 0.0
  %943 = vmatprep.subr.mxu0 0.0
  %944 = vmatpush1.msra.mxu0 0.0
  %945 = vmatprep.subr.mxu0 0.0
  %946 = vmatpush1.msra.mxu0 0.0
  %947 = vmatprep.subr.mxu0 %v219
  %948 = vmatpush1.msra.mxu0 %v218
  %949 = vmatprep.subr.mxu0 %v217
  %950 = vmatpush1.msra.mxu0 %v216
  %951 = vmatprep.subr.mxu0 %v215
  %952 = vmatpush1.msra.mxu0 %v214
  %953 = vmatprep.subr.mxu0 %v213
  %954 = vmatpush1.msra.mxu0 %v212
  %955 = vmatprep.subr.mxu0 %v211
  %956 = vmatpush1.msra.mxu0 %v210
  %957 = vmatprep.subr.mxu0 %v209
  %958 = vmatpush1.msra.mxu0 %v208
  %959 = vmatprep.subr.mxu0 %v207
  %960 = vmatpush1.msra.mxu0 %v206
  %961 = vmatprep.subr.mxu0 %v205
  %962 = vmatpush1.msra.mxu0 %v204
  %963 = vmatprep.subr.mxu0 0.0
  %964 = vmatpush2.msra.mxu0 0.0
  %965 = vmatprep.subr.mxu0 0.0
  %966 = vmatpush2.msra.mxu0 0.0
  %967 = vmatprep.subr.mxu0 0.0
  %968 = vmatpush2.msra.mxu0 0.0
  %969 = vmatprep.subr.mxu0 0.0
  %970 = vmatpush2.msra.mxu0 0.0
  %971 = vmatprep.subr.mxu0 0.0
  %972 = vmatpush2.msra.mxu0 0.0
  %973 = vmatprep.subr.mxu0 0.0
  %974 = vmatpush2.msra.mxu0 0.0
  %975 = vmatprep.subr.mxu0 0.0
  %976 = vmatpush2.msra.mxu0 0.0
  %977 = vmatprep.subr.mxu0 0.0
  %978 = vmatpush2.msra.mxu0 0.0
  %979 = vmatprep.subr.mxu0 0.0
  %980 = vmatpush2.msra.mxu0 0.0
  %981 = vmatprep.subr.mxu0 0.0
  %982 = vmatpush2.msra.mxu0 0.0
  %983 = vmatprep.subr.mxu0 0.0
  %984 = vmatpush2.msra.mxu0 0.0
  %985 = vmatprep.subr.mxu0 0.0
  %986 = vmatpush2.msra.mxu0 0.0
  %987 = vmatprep.subr.mxu0 0.0
  %988 = vmatpush2.msra.mxu0 0.0
  %989 = vmatprep.subr.mxu0 0.0
  %990 = vmatpush2.msra.mxu0 0.0
  %991 = vmatprep.subr.mxu0 0.0
  %992 = vmatpush2.msra.mxu0 0.0
  %993 = vmatprep.subr.mxu0 0.0
  %994 = vmatpush2.msra.mxu0 0.0
  %995 = vmatprep.mubr.f32.mxu0 0.0
  %996 = vmatmul.mubr.f32.gmra.mxu0 %v929
  %v997 = vpop.f32.mrf.mxu0
  %v998 = vadd.f32 0.0, %v997
  %v999 = vpop.f32.mrf.mxu0
  %v1000 = vadd.f32 0.0, %v999
  %1001 = vdwg.mxu0
  %v1002 = vadd.f32 %v926, %v998
  %v1003 = vadd.f32 %v927, %v1000
  %v1004 = vtanh.pop %v1002
  %v1005 = vtanh.pop %v1003
  %v1006 = vmul.f32 %v1004, 0.5
  %v1007 = vmul.f32 %v1005, 0.5
  %v1008 = vadd.f32 %v1006, 0.5
  %v1009 = vadd.f32 %v1007, 0.5
  %1011 = vrot.lane.b32.xlu0 %v924, 64
  %v1012 = vpop.permute.xlu0 %1011
  %v1014 = vmul.f32 %v1008, %v1012
  %v1015 = vmul.f32 %v1008, %v1005
  %1017 = vrot.lane.b32.xlu0 %v1015, 64
  %v1018 = vpop.permute.xlu0 %1017
  %v1020 = vadd.f32 %v1014, %v1018
  %v1021 = vtanh.pop %v1020
  %v1022 = vmul.f32 %v1009, %v1021
  %v1023 = vsub.s32 6, %v220
  %vm1024 = vcmp.ge.s32.totalorder %v1023, 0
  %vm1025 = vcmp.lt.s32.totalorder %v1023, 8
  %vm1026 = vmand %vm1024, %vm1025
  %v1027 = vsel %vm1026, 1, 0
  %v1028 = vlaneseq
  %v1029 = vshrl.u32 %v1028, 7
  %v1030 = vsub.s32 0, %v1029
  %v1031 = vrot.slane %v1027, %v1030
  %vm1032 = vcmp.eq.s32.totalorder %v1031, 1
  %1034 = vrot.lane.b32.xlu0 %v1022, 64
  %v1035 = vpop.permute.xlu0 %1034
  %v1037 = vsel %vm1032, %v1035, %v919
  %1039 = vrot.lane.b32.xlu0 %v1020, 64
  %v1040 = vpop.permute.xlu0 %1039
  %v1042 = vsel %vm1032, %v1040, %v924
  %s1043 = scalar_lea.vmem [#allocation2], 112
  %v1044 = vld [vmem:[%s1043] sm:$0xff]
  %v1045 = vld [vmem:[%s1043 + $0x8] sm:$0xff]
  %v1047 = vsel %vm223, %v1037, 0
  %1049 = vmatprep.subr.mxu0 0.0
  %1050 = vmatpush1.msra.mxu0 0.0
  %1051 = vmatprep.subr.mxu0 0.0
  %1052 = vmatpush1.msra.mxu0 0.0
  %1053 = vmatprep.subr.mxu0 0.0
  %1054 = vmatpush1.msra.mxu0 0.0
  %1055 = vmatprep.subr.mxu0 0.0
  %1056 = vmatpush1.msra.mxu0 0.0
  %1057 = vmatprep.subr.mxu0 0.0
  %1058 = vmatpush1.msra.mxu0 0.0
  %1059 = vmatprep.subr.mxu0 0.0
  %1060 = vmatpush1.msra.mxu0 0.0
  %1061 = vmatprep.subr.mxu0 0.0
  %1062 = vmatpush1.msra.mxu0 0.0
  %1063 = vmatprep.subr.mxu0 0.0
  %1064 = vmatpush1.msra.mxu0 0.0
  %1065 = vmatprep.subr.mxu0 %v219
  %1066 = vmatpush1.msra.mxu0 %v218
  %1067 = vmatprep.subr.mxu0 %v217
  %1068 = vmatpush1.msra.mxu0 %v216
  %1069 = vmatprep.subr.mxu0 %v215
  %1070 = vmatpush1.msra.mxu0 %v214
  %1071 = vmatprep.subr.mxu0 %v213
  %1072 = vmatpush1.msra.mxu0 %v212
  %1073 = vmatprep.subr.mxu0 %v211
  %1074 = vmatpush1.msra.mxu0 %v210
  %1075 = vmatprep.subr.mxu0 %v209
  %1076 = vmatpush1.msra.mxu0 %v208
  %1077 = vmatprep.subr.mxu0 %v207
  %1078 = vmatpush1.msra.mxu0 %v206
  %1079 = vmatprep.subr.mxu0 %v205
  %1080 = vmatpush1.msra.mxu0 %v204
  %1081 = vmatprep.subr.mxu0 0.0
  %1082 = vmatpush2.msra.mxu0 0.0
  %1083 = vmatprep.subr.mxu0 0.0
  %1084 = vmatpush2.msra.mxu0 0.0
  %1085 = vmatprep.subr.mxu0 0.0
  %1086 = vmatpush2.msra.mxu0 0.0
  %1087 = vmatprep.subr.mxu0 0.0
  %1088 = vmatpush2.msra.mxu0 0.0
  %1089 = vmatprep.subr.mxu0 0.0
  %1090 = vmatpush2.msra.mxu0 0.0
  %1091 = vmatprep.subr.mxu0 0.0
  %1092 = vmatpush2.msra.mxu0 0.0
  %1093 = vmatprep.subr.mxu0 0.0
  %1094 = vmatpush2.msra.mxu0 0.0
  %1095 = vmatprep.subr.mxu0 0.0
  %1096 = vmatpush2.msra.mxu0 0.0
  %1097 = vmatprep.subr.mxu0 0.0
  %1098 = vmatpush2.msra.mxu0 0.0
  %1099 = vmatprep.subr.mxu0 0.0
  %1100 = vmatpush2.msra.mxu0 0.0
  %1101 = vmatprep.subr.mxu0 0.0
  %1102 = vmatpush2.msra.mxu0 0.0
  %1103 = vmatprep.subr.mxu0 0.0
  %1104 = vmatpush2.msra.mxu0 0.0
  %1105 = vmatprep.subr.mxu0 0.0
  %1106 = vmatpush2.msra.mxu0 0.0
  %1107 = vmatprep.subr.mxu0 0.0
  %1108 = vmatpush2.msra.mxu0 0.0
  %1109 = vmatprep.subr.mxu0 0.0
  %1110 = vmatpush2.msra.mxu0 0.0
  %1111 = vmatprep.subr.mxu0 0.0
  %1112 = vmatpush2.msra.mxu0 0.0
  %1113 = vmatprep.mubr.f32.mxu0 0.0
  %1114 = vmatmul.mubr.f32.gmra.mxu0 %v1047
  %v1115 = vpop.f32.mrf.mxu0
  %v1116 = vadd.f32 0.0, %v1115
  %v1117 = vpop.f32.mrf.mxu0
  %v1118 = vadd.f32 0.0, %v1117
  %1119 = vdwg.mxu0
  %v1120 = vadd.f32 %v1044, %v1116
  %v1121 = vadd.f32 %v1045, %v1118
  %v1122 = vtanh.pop %v1120
  %v1123 = vtanh.pop %v1121
  %v1124 = vmul.f32 %v1122, 0.5
  %v1125 = vmul.f32 %v1123, 0.5
  %v1126 = vadd.f32 %v1124, 0.5
  %v1127 = vadd.f32 %v1125, 0.5
  %1129 = vrot.lane.b32.xlu0 %v1042, 64
  %v1130 = vpop.permute.xlu0 %1129
  %v1132 = vmul.f32 %v1126, %v1130
  %v1133 = vmul.f32 %v1126, %v1123
  %1135 = vrot.lane.b32.xlu0 %v1133, 64
  %v1136 = vpop.permute.xlu0 %1135
  %v1138 = vadd.f32 %v1132, %v1136
  %v1139 = vtanh.pop %v1138
  %v1140 = vmul.f32 %v1127, %v1139
  %v1141 = vsub.s32 7, %v220
  %vm1142 = vcmp.ge.s32.totalorder %v1141, 0
  %vm1143 = vcmp.lt.s32.totalorder %v1141, 8
  %vm1144 = vmand %vm1142, %vm1143
  %v1145 = vsel %vm1144, 1, 0
  %v1146 = vlaneseq
  %v1147 = vshrl.u32 %v1146, 7
  %v1148 = vsub.s32 0, %v1147
  %v1149 = vrot.slane %v1145, %v1148
  %vm1150 = vcmp.eq.s32.totalorder %v1149, 1
  %1152 = vrot.lane.b32.xlu0 %v1140, 64
  %v1153 = vpop.permute.xlu0 %1152
  %v1155 = vsel %vm1150, %v1153, %v1037
  %1157 = vrot.lane.b32.xlu0 %v1138, 64
  %v1158 = vpop.permute.xlu0 %1157
  %v1160 = vsel %vm1150, %v1158, %v1042
  %v1162 = vsel %vm223, %v1155, 0
  %1164 = vmatprep.subr.mxu0 0.0
  %1165 = vmatpush1.msra.mxu0 0.0
  %1166 = vmatprep.subr.mxu0 0.0
  %1167 = vmatpush1.msra.mxu0 0.0
  %1168 = vmatprep.subr.mxu0 0.0
  %1169 = vmatpush1.msra.mxu0 0.0
  %1170 = vmatprep.subr.mxu0 0.0
  %1171 = vmatpush1.msra.mxu0 0.0
  %1172 = vmatprep.subr.mxu0 0.0
  %1173 = vmatpush1.msra.mxu0 0.0
  %1174 = vmatprep.subr.mxu0 0.0
  %1175 = vmatpush1.msra.mxu0 0.0
  %1176 = vmatprep.subr.mxu0 0.0
  %1177 = vmatpush1.msra.mxu0 0.0
  %1178 = vmatprep.subr.mxu0 0.0
  %1179 = vmatpush1.msra.mxu0 0.0
  %1180 = vmatprep.subr.mxu0 %v219
  %1181 = vmatpush1.msra.mxu0 %v218
  %1182 = vmatprep.subr.mxu0 %v217
  %1183 = vmatpush1.msra.mxu0 %v216
  %1184 = vmatprep.subr.mxu0 %v215
  %1185 = vmatpush1.msra.mxu0 %v214
  %1186 = vmatprep.subr.mxu0 %v213
  %1187 = vmatpush1.msra.mxu0 %v212
  %1188 = vmatprep.subr.mxu0 %v211
  %1189 = vmatpush1.msra.mxu0 %v210
  %1190 = vmatprep.subr.mxu0 %v209
  %1191 = vmatpush1.msra.mxu0 %v208
  %1192 = vmatprep.subr.mxu0 %v207
  %1193 = vmatpush1.msra.mxu0 %v206
  %1194 = vmatprep.subr.mxu0 %v205
  %1195 = vmatpush1.msra.mxu0 %v204
  %1196 = vmatprep.subr.mxu0 0.0
  %1197 = vmatpush2.msra.mxu0 0.0
  %1198 = vmatprep.subr.mxu0 0.0
  %1199 = vmatpush2.msra.mxu0 0.0
  %1200 = vmatprep.subr.mxu0 0.0
  %1201 = vmatpush2.msra.mxu0 0.0
  %1202 = vmatprep.subr.mxu0 0.0
  %1203 = vmatpush2.msra.mxu0 0.0
  %1204 = vmatprep.subr.mxu0 0.0
  %1205 = vmatpush2.msra.mxu0 0.0
  %1206 = vmatprep.subr.mxu0 0.0
  %1207 = vmatpush2.msra.mxu0 0.0
  %1208 = vmatprep.subr.mxu0 0.0
  %1209 = vmatpush2.msra.mxu0 0.0
  %1210 = vmatprep.subr.mxu0 0.0
  %1211 = vmatpush2.msra.mxu0 0.0
  %1212 = vmatprep.subr.mxu0 0.0
  %1213 = vmatpush2.msra.mxu0 0.0
  %1214 = vmatprep.subr.mxu0 0.0
  %1215 = vmatpush2.msra.mxu0 0.0
  %1216 = vmatprep.subr.mxu0 0.0
  %1217 = vmatpush2.msra.mxu0 0.0
  %1218 = vmatprep.subr.mxu0 0.0
  %1219 = vmatpush2.msra.mxu0 0.0
  %1220 = vmatprep.subr.mxu0 0.0
  %1221 = vmatpush2.msra.mxu0 0.0
  %1222 = vmatprep.subr.mxu0 0.0
  %1223 = vmatpush2.msra.mxu0 0.0
  %1224 = vmatprep.subr.mxu0 0.0
  %1225 = vmatpush2.msra.mxu0 0.0
  %1226 = vmatprep.subr.mxu0 0.0
  %1227 = vmatpush2.msra.mxu0 0.0
  %1228 = vmatprep.mubr.f32.mxu0 0.0
  %1229 = vmatmul.mubr.f32.gmra.mxu0 %v1162
  %v1230 = vpop.f32.mrf.mxu0
  %v1231 = vadd.f32 0.0, %v1230
  %v1232 = vpop.f32.mrf.mxu0
  %v1233 = vadd.f32 0.0, %v1232
  %1234 = vdwg.mxu0
  %v1235 = vadd.f32 %v1044, %v1231
  %v1236 = vadd.f32 %v1045, %v1233
  %v1237 = vtanh.pop %v1235
  %v1238 = vtanh.pop %v1236
  %v1239 = vmul.f32 %v1237, 0.5
  %v1240 = vmul.f32 %v1238, 0.5
  %v1241 = vadd.f32 %v1239, 0.5
  %v1242 = vadd.f32 %v1240, 0.5
  %1244 = vrot.lane.b32.xlu0 %v1160, 64
  %v1245 = vpop.permute.xlu0 %1244
  %v1247 = vmul.f32 %v1241, %v1245
  %v1248 = vmul.f32 %v1241, %v1238
  %1250 = vrot.lane.b32.xlu0 %v1248, 64
  %v1251 = vpop.permute.xlu0 %1250
  %v1253 = vadd.f32 %v1247, %v1251
  %v1254 = vtanh.pop %v1253
  %v1255 = vmul.f32 %v1242, %v1254
  %v1256 = vsub.s32 8, %v220
  %vm1257 = vcmp.ge.s32.totalorder %v1256, 0
  %vm1258 = vcmp.lt.s32.totalorder %v1256, 8
  %vm1259 = vmand %vm1257, %vm1258
  %v1260 = vsel %vm1259, 1, 0
  %v1261 = vlaneseq
  %v1262 = vshrl.u32 %v1261, 7
  %v1263 = vsub.s32 0, %v1262
  %v1264 = vrot.slane %v1260, %v1263
  %vm1265 = vcmp.eq.s32.totalorder %v1264, 1
  %1267 = vrot.lane.b32.xlu0 %v1255, 64
  %v1268 = vpop.permute.xlu0 %1267
  %v1270 = vsel %vm1265, %v1268, %v1155
  %v1271 = vld [vmem:[%s5] sm:$0xff]
  %v1272 = vld [vmem:[%s5 + $0x8] sm:$0xff]
  %v1273 = vld [vmem:[%s5 + $0x10] sm:$0xff]
  %v1274 = vld [vmem:[%s5 + $0x18] sm:$0xff]
  %v1275 = vld [vmem:[%s6] sm:$0x1]
  %v1277 = vlaneseq
  %v1278 = vshrl.u32 %v1277, 7
  %v1279 = vsub.s32 0, %v1278
  %v1280 = vrot.slane %v1275, %v1279
  %1283 = vrot.lane.b32.xlu0 %v1270, 96
  %v1284 = vpop.permute.xlu0 %1283
  %vm1285 = vcmask 261120
  %v1286 = vsel %vm1285, %v1284, 0
  %1288 = vmatprep.subr.mxu0 0.0
  %1289 = vmatpush1.msra.mxu0 0.0
  %1290 = vmatprep.subr.mxu0 0.0
  %1291 = vmatpush1.msra.mxu0 0.0
  %1292 = vmatprep.subr.mxu0 0.0
  %1293 = vmatpush1.msra.mxu0 0.0
  %1294 = vmatprep.subr.mxu0 0.0
  %1295 = vmatpush1.msra.mxu0 0.0
  %1296 = vmatprep.subr.mxu0 0.0
  %1297 = vmatpush1.msra.mxu0 0.0
  %1298 = vmatprep.subr.mxu0 0.0
  %1299 = vmatpush1.msra.mxu0 0.0
  %1300 = vmatprep.subr.mxu0 0.0
  %1301 = vmatpush1.msra.mxu0 0.0
  %1302 = vmatprep.subr.mxu0 0.0
  %1303 = vmatpush1.msra.mxu0 0.0
  %1304 = vmatprep.subr.mxu0 0.0
  %1305 = vmatpush1.msra.mxu0 0.0
  %1306 = vmatprep.subr.mxu0 0.0
  %1307 = vmatpush1.msra.mxu0 0.0
  %1308 = vmatprep.subr.mxu0 0.0
  %1309 = vmatpush1.msra.mxu0 0.0
  %1310 = vmatprep.subr.mxu0 0.0
  %1311 = vmatpush1.msra.mxu0 0.0
  %1312 = vmatprep.subr.mxu0 0.0
  %1313 = vmatpush1.msra.mxu0 %v1274
  %1314 = vmatprep.subr.mxu0 0.0
  %1315 = vmatpush1.msra.mxu0 %v1273
  %1316 = vmatprep.subr.mxu0 0.0
  %1317 = vmatpush1.msra.mxu0 %v1272
  %1318 = vmatprep.subr.mxu0 0.0
  %1319 = vmatpush1.msra.mxu0 %v1271
  %1320 = vmatprep.subr.mxu0 0.0
  %1321 = vmatpush2.msra.mxu0 0.0
  %1322 = vmatprep.subr.mxu0 0.0
  %1323 = vmatpush2.msra.mxu0 0.0
  %1324 = vmatprep.subr.mxu0 0.0
  %1325 = vmatpush2.msra.mxu0 0.0
  %1326 = vmatprep.subr.mxu0 0.0
  %1327 = vmatpush2.msra.mxu0 0.0
  %1328 = vmatprep.subr.mxu0 0.0
  %1329 = vmatpush2.msra.mxu0 0.0
  %1330 = vmatprep.subr.mxu0 0.0
  %1331 = vmatpush2.msra.mxu0 0.0
  %1332 = vmatprep.subr.mxu0 0.0
  %1333 = vmatpush2.msra.mxu0 0.0
  %1334 = vmatprep.subr.mxu0 0.0
  %1335 = vmatpush2.msra.mxu0 0.0
  %1336 = vmatprep.subr.mxu0 0.0
  %1337 = vmatpush2.msra.mxu0 0.0
  %1338 = vmatprep.subr.mxu0 0.0
  %1339 = vmatpush2.msra.mxu0 0.0
  %1340 = vmatprep.subr.mxu0 0.0
  %1341 = vmatpush2.msra.mxu0 0.0
  %1342 = vmatprep.subr.mxu0 0.0
  %1343 = vmatpush2.msra.mxu0 0.0
  %1344 = vmatprep.subr.mxu0 0.0
  %1345 = vmatpush2.msra.mxu0 0.0
  %1346 = vmatprep.subr.mxu0 0.0
  %1347 = vmatpush2.msra.mxu0 0.0
  %1348 = vmatprep.subr.mxu0 0.0
  %1349 = vmatpush2.msra.mxu0 0.0
  %1350 = vmatprep.subr.mxu0 0.0
  %1351 = vmatpush2.msra.mxu0 0.0
  %1352 = vmatprep.mubr.f32.mxu0 0.0
  %1353 = vmatmul.mubr.f32.gmra.mxu0 %v1286
  %v1354 = vpop.f32.mrf.mxu0
  %v1355 = vadd.f32 %v1280, %v1354
  %v1356 = vpop.f32.mrf.mxu0
  %1357 = vdwg.mxu0
  %vm1358 = vcmask 15360
  %1359 = vst.msk [vmem:[%s7] sm:$0xff] %vm1358, %v1355
  // Predicated region
  $region30: #{lstm_model_forward.1} parent=0 // pred_check
    _
  $region31: #{lstm_model_forward.1} parent=0 // pred_check_branch
    %1361 = sbr.rel (0) target = $region33
  $region32: #{lstm_model_forward.1} parent=0 // pred_region
    _
  $region33: #{lstm_model_forward.1} parent=0 // pred_fallthru
    _
  // Predicated region
  $region34: #{lstm_model_forward.1} parent=0 // pred_check
    _
  $region35: #{lstm_model_forward.1} parent=0 // pred_check_branch
    %1363 = sbr.rel (0) target = $region37
  $region36: #{lstm_model_forward.1} parent=0 // pred_region
    _
  $region37: #{lstm_model_forward.1} parent=0 // pred_fallthru
    _

</llo_original>
